<compile_context>
chip_gen: v6e
topology: v6e:2x2x1
jax: 0.10.0
libtpu: 0.0.40
codegen_flags: <defaults>
</compile_context>

<pallas_src>
import functools
import math

import numpy as np
import jax
import jax.numpy as jnp
from jax.experimental import pallas as pl
from jax.experimental.pallas import tpu as pltpu


# ---------------------------------------------------------------------------
# One bidirectional GRU layer; both directions interleaved in one unrolled loop.
# Gate/lane layout of the 6H axis (and of all combined weights/biases):
#   [ r_fwd | r_bwd | z_fwd | z_bwd | n_fwd | n_bwd ]
# so every per-gate (B, 2H) slice lines up with the (B, 2H) [h_fwd | h_bwd] state.
# ---------------------------------------------------------------------------
def _bidir_gru_layer(x_bf16, wih, bias, whh, bhn, *, T, B, H):
    H2, H4, H6 = 2 * H, 4 * H, 6 * H

    # Hoisted input projection: both directions, all gates, all timesteps, one matmul.
    # bias already contains b_ih (all gates) + b_hh (r, z gates only).
    gi = jnp.dot(x_bf16, wih, preferred_element_type=jnp.float32) + bias    # (T*B, 6H) f32

    # Lane mask selecting the forward direction's gate columns of the 6H axis.
    lane = jax.lax.broadcasted_iota(jnp.int32, (1, H6), 1)
    fwd_lane = (lane % H2) < H                                              # (1, 6H) bool

    h = jnp.zeros((B, H2), jnp.float32)      # [h_fwd | h_bwd]
    hs = []
    for s in range(T):                       # static, fully unrolled (T is small)
        row_f = s * B                        # fwd consumes time s
        row_b = (T - 1 - s) * B              # bwd consumes time T-1-s (same iteration)
        gi_s = jnp.where(fwd_lane, gi[row_f:row_f + B, :], gi[row_b:row_b + B, :])

        # One block-diagonal matmul serves all 3 gates of both directions.
        gh = jnp.dot(h.astype(jnp.bfloat16), whh,
                     preferred_element_type=jnp.float32)                    # (B, 6H)

        rz = jax.nn.sigmoid(gi_s[:, :H4] + gh[:, :H4])                      # r|z, both dirs
        r = rz[:, :H2]
        z = rz[:, H2:]
        n = jnp.tanh(gi_s[:, H4:] + r * (gh[:, H4:] + bhn))                 # b_hh_n inside r*(...)
        h = (1.0 - z) * n + z * h
        hs.append(h)

    # Assemble the (T*B, 2H) time-major layer output once (single whole-slab value;
    # no per-step masked stores).  bwd half is time-reversed back to forward order.
    seq_f = jnp.concatenate([hs[t][:, :H] for t in range(T)], axis=0)       # (T*B, H)
    seq_b = jnp.concatenate([hs[T - 1 - t][:, H:] for t in range(T)], axis=0)
    seq = jnp.concatenate([seq_f, seq_b], axis=1)                           # (T*B, 2H)

    h_last = hs[T - 1]                       # fwd final (time T-1) and bwd final (time 0)
    return seq, h_last[:, :H], h_last[:, H:]


# ---------------------------------------------------------------------------
# Fused whole-network kernel:
#   layer0 (fwd+bwd) -> layer1 (fwd+bwd) -> FC(2H,16) -> ReLU -> FC(16,1) -> Sigmoid
# ---------------------------------------------------------------------------
def _gru_sex_net_kernel(x_ref,
                        wih0_ref, b0_ref, whh0_ref, bhn0_ref,
                        wih1_ref, b1_ref, whh1_ref, bhn1_ref,
                        fcw1_ref, fcb1_ref, fcw2_ref, fcb2_ref,
                        y_ref, aout_ref, *, T, B, H):
    x = x_ref[...]                                                          # (T*B, Din) bf16

    seq0, h0f, h0b = _bidir_gru_layer(
        x, wih0_ref[...], b0_ref[...], whh0_ref[...], bhn0_ref[...], T=T, B=B, H=H)
    seq1, h1f, h1b = _bidir_gru_layer(
        seq0.astype(jnp.bfloat16), wih1_ref[...], b1_ref[...], whh1_ref[...],
        bhn1_ref[...], T=T, B=B, H=H)

    # ---- FC head fused into the same kernel ----
    hfc = jnp.dot(seq1.astype(jnp.bfloat16), fcw1_ref[...],
                  preferred_element_type=jnp.float32) + fcb1_ref[...]
    hfc = jnp.maximum(hfc, 0.0)
    y = jnp.dot(hfc.astype(jnp.bfloat16), fcw2_ref[...],
                preferred_element_type=jnp.float32) + fcb2_ref[...]
    y_ref[...] = jax.nn.sigmoid(y)                                          # (T*B, 1)

    # Dense packed final hidden states: rows [l0_fwd | l0_bwd | l1_fwd | l1_bwd].
    aout_ref[...] = jnp.concatenate([h0f, h0b, h1f, h1b], axis=0)           # (4*B, H)


# ---------------------------------------------------------------------------
# Host-side one-time weight re-layout (hoisted out of the forward path).
# ---------------------------------------------------------------------------
def prepare_params(params, in_ax, hidden):
    H = hidden

    def split_ih(p, d_in):   # PyTorch w_ih (3H, d_in), rows [r|z|n] -> 3x (d_in, H)
        w = jnp.asarray(p["w_ih"], jnp.float32).reshape(3, H, d_in)
        return [jnp.transpose(w[g]) for g in range(3)]

    def split_hh(p):         # PyTorch w_hh (3H, H) -> 3x (H, H) right-multiply matrices
        w = jnp.asarray(p["w_hh"], jnp.float32).reshape(3, H, H)
        return [jnp.transpose(w[g]) for g in range(3)]

    def layer_args(layer_p, d_in):
        f, b = layer_p["fwd"], layer_p["bwd"]
        wf_ih, wb_ih = split_ih(f, d_in), split_ih(b, d_in)
        wf_hh, wb_hh = split_hh(f), split_hh(b)
        bf_ih = jnp.asarray(f["b_ih"], jnp.float32).reshape(3, H)
        bb_ih = jnp.asarray(b["b_ih"], jnp.float32).reshape(3, H)
        bf_hh = jnp.asarray(f["b_hh"], jnp.float32).reshape(3, H)
        bb_hh = jnp.asarray(b["b_hh"], jnp.float32).reshape(3, H)

        # Column order: [r_f | r_b | z_f | z_b | n_f | n_b].
        w_ih = jnp.concatenate(
            [wf_ih[0], wb_ih[0], wf_ih[1], wb_ih[1], wf_ih[2], wb_ih[2]], axis=1)
        # b_hh folded into r,z; n gate keeps only b_ih (b_hh_n stays inside r*(...)).
        bias = jnp.concatenate(
            [bf_ih[0] + bf_hh[0], bb_ih[0] + bb_hh[0],
             bf_ih[1] + bf_hh[1], bb_ih[1] + bb_hh[1],
             bf_ih[2], bb_ih[2]], axis=0).reshape(1, 6 * H)
        bhn = jnp.concatenate([bf_hh[2], bb_hh[2]], axis=0).reshape(1, 2 * H)

        zero = jnp.zeros((H, H), jnp.float32)
        row_f = jnp.concatenate([wf_hh[0], zero, wf_hh[1], zero, wf_hh[2], zero], axis=1)
        row_b = jnp.concatenate([zero, wb_hh[0], zero, wb_hh[1], zero, wb_hh[2]], axis=1)
        w_hh = jnp.concatenate([row_f, row_b], axis=0)      # (2H, 6H) block-diagonal

        return [w_ih.astype(jnp.bfloat16), bias,
                w_hh.astype(jnp.bfloat16), bhn]

    args = []
    args += layer_args(params["gru"][0], in_ax)
    args += layer_args(params["gru"][1], 2 * H)

    fc = params["fc"]
    args += [jnp.transpose(jnp.asarray(fc["w1"], jnp.float32)).astype(jnp.bfloat16),  # (2H,16)
             jnp.asarray(fc["b1"], jnp.float32).reshape(1, -1),                        # (1,16)
             jnp.transpose(jnp.asarray(fc["w2"], jnp.float32)).astype(jnp.bfloat16),  # (16,1)
             jnp.asarray(fc["b2"], jnp.float32).reshape(1, 1)]                         # (1,1)
    return tuple(args)


# ---------------------------------------------------------------------------
# Forward wrapper: single pallas_call (jit-able; kparams come from prepare_params).
# ---------------------------------------------------------------------------
def gru_sex_net_forward(x_btd, kparams):
    """x_btd: (B, T, in_ax) -> (y_pred (B, T, 1), a_out (4, B, H))."""
    B, T, Din = x_btd.shape
    H = kparams[2].shape[0] // 2                               # layer-0 W_hh is (2H, 6H)

    # time-major flat input: row t*B + b == x[b, t]
    x_flat = jnp.transpose(x_btd, (1, 0, 2)).reshape(T * B, Din).astype(jnp.bfloat16)
    inputs = (x_flat,) + tuple(kparams)

    def full_spec(a):
        nd = a.ndim
        return pl.BlockSpec(a.shape, lambda i, _nd=nd: (0,) * _nd)   # block index 0 per dim

    kernel = functools.partial(_gru_sex_net_kernel, T=T, B=B, H=H)
    y_flat, aout = pl.pallas_call(
        kernel,
        out_shape=(jax.ShapeDtypeStruct((T * B, 1), jnp.float32),
                   jax.ShapeDtypeStruct((4 * B, H), jnp.float32)),
        grid_spec=pltpu.PrefetchScalarGridSpec(
            num_scalar_prefetch=0,
            grid=(1,),
            in_specs=[full_spec(a) for a in inputs],
            out_specs=(pl.BlockSpec((T * B, 1), lambda i: (0, 0)),
                       pl.BlockSpec((4 * B, H), lambda i: (0, 0))),
        ),
        compiler_params=pltpu.CompilerParams(
            dimension_semantics=("arbitrary",)),
    )(*inputs)

    y_pred = y_flat.reshape(T, B, 1).transpose(1, 0, 2)        # (B, T, 1)
    a_out = aout.reshape(4, B, H)                              # [l0f, l0b, l1f, l1b]
    return y_pred, a_out


# ---------------------------------------------------------------------------
# Parameter init (PyTorch-style uniform)
# ---------------------------------------------------------------------------
def init_params(key, in_ax, hidden, num_layers=2, bidirectional=True):
    D = 2 if bidirectional else 1
    k_gru = 1.0 / math.sqrt(hidden)
    params = {"gru": []}
    keys = jax.random.split(key, num_layers * D * 4 + 4)
    ki = 0

    def u(shape, bound):
        nonlocal ki
        arr = jax.random.uniform(keys[ki], shape, jnp.float32, -bound, bound)
        ki += 1
        return arr

    for layer in range(num_layers):
        d_in = in_ax if layer == 0 else hidden * D
        layer_p = {}
        for dname in (["fwd", "bwd"] if bidirectional else ["fwd"]):
            layer_p[dname] = {
                "w_ih": u((3 * hidden, d_in), k_gru),
                "w_hh": u((3 * hidden, hidden), k_gru),
                "b_ih": u((3 * hidden,), k_gru),
                "b_hh": u((3 * hidden,), k_gru),
            }
        params["gru"].append(layer_p)

    fc_in = hidden * D
    params["fc"] = {
        "w1": u((16, fc_in), 1.0 / math.sqrt(fc_in)),
        "b1": u((16,), 1.0 / math.sqrt(fc_in)),
        "w2": u((1, 16), 1.0 / math.sqrt(16)),
        "b2": u((1,), 1.0 / math.sqrt(16)),
    }
    return params


# ---------------------------------------------------------------------------
# Pure-JAX f32 reference (same math, no Pallas) for a correctness sanity check
# ---------------------------------------------------------------------------
def _ref_gru_dir(x_tbd, p, hidden):
    T, B, _ = x_tbd.shape
    hp = jnp.zeros((B, hidden), jnp.float32)
    dot = functools.partial(jnp.dot, precision=jax.lax.Precision.HIGHEST)
    hs = []
    for t in range(T):
        gi = dot(x_tbd[t], p["w_ih"].T) + p["b_ih"]
        gh = dot(hp, p["w_hh"].T) + p["b_hh"]
        r = jax.nn.sigmoid(gi[:, :hidden] + gh[:, :hidden])
        z = jax.nn.sigmoid(gi[:, hidden:2 * hidden] + gh[:, hidden:2 * hidden])
        n = jnp.tanh(gi[:, 2 * hidden:] + r * gh[:, 2 * hidden:])
        hp = (1.0 - z) * n + z * hp
        hs.append(hp)
    return jnp.stack(hs, axis=0), hp


def _ref_forward(x_btd, params, hidden, num_layers=2):
    layer_in = jnp.transpose(x_btd, (1, 0, 2)).astype(jnp.float32)
    h_finals = []
    for layer in range(num_layers):
        hseq_f, hlast_f = _ref_gru_dir(layer_in, params["gru"][layer]["fwd"], hidden)
        hseq_b_rev, hlast_b = _ref_gru_dir(layer_in[::-1], params["gru"][layer]["bwd"], hidden)
        layer_in = jnp.concatenate([hseq_f, hseq_b_rev[::-1]], axis=-1)
        h_finals += [hlast_f, hlast_b]
    gru_out = jnp.transpose(layer_in, (1, 0, 2))
    dot = functools.partial(jnp.dot, precision=jax.lax.Precision.HIGHEST)
    fc = params["fc"]
    h = jnp.maximum(dot(gru_out, fc["w1"].T) + fc["b1"], 0.0)
    y = jax.nn.sigmoid(dot(h, fc["w2"].T) + fc["b2"])
    return y, jnp.stack(h_finals, axis=0)


if __name__ == "__main__":
    # small shapes consistent with the module's forward:
    # x: (batch=2, seq=8, in_ax=16); hidden (aa_channels)=32; 2 layers, bidirectional.
    B, T, IN_AX, HIDDEN, NUM_LAYERS = 2, 8, 16, 32, 2

    key = jax.random.PRNGKey(0)
    kx, kp = jax.random.split(key)
    x = jax.random.normal(kx, (B, T, IN_AX), jnp.float32)
    params = init_params(kp, IN_AX, HIDDEN, NUM_LAYERS, bidirectional=True)

    # One-time weight re-layout hoisted out of the forward path.
    kparams = prepare_params(params, IN_AX, HIDDEN)
    fwd = jax.jit(gru_sex_net_forward)

    y_pred, a_out = fwd(x, kparams)
    y_pred = jax.block_until_ready(y_pred)
    a_out = jax.block_until_ready(a_out)

    assert y_pred.shape == (B, T, 1)
    assert a_out.shape == (NUM_LAYERS * 2, B, HIDDEN)

    y_ref, a_ref = _ref_forward(x, params, HIDDEN, NUM_LAYERS)
    # bf16 MXU operands (f32 accumulate + f32 elementwise) -> ~1e-2-level agreement.
    np.testing.assert_allclose(np.asarray(y_pred), np.asarray(y_ref), atol=2.5e-2, rtol=2.5e-2)
    np.testing.assert_allclose(np.asarray(a_out), np.asarray(a_ref), atol=2.5e-2, rtol=2.5e-2)

    print("KERNEL_OK")
</pallas_src>

<mosaic_0001>
module attributes {stable_mosaic.version = 11 : i64} {
  func.func @_gru_sex_net_kernel(%arg0: i32, %arg1: memref<16x16xbf16, #tpu.memory_space<vmem>>, %arg2: memref<16x192xbf16, #tpu.memory_space<vmem>>, %arg3: memref<1x192xf32, #tpu.memory_space<vmem>>, %arg4: memref<64x192xbf16, #tpu.memory_space<vmem>>, %arg5: memref<1x64xf32, #tpu.memory_space<vmem>>, %arg6: memref<64x192xbf16, #tpu.memory_space<vmem>>, %arg7: memref<1x192xf32, #tpu.memory_space<vmem>>, %arg8: memref<64x192xbf16, #tpu.memory_space<vmem>>, %arg9: memref<1x64xf32, #tpu.memory_space<vmem>>, %arg10: memref<64x16xbf16, #tpu.memory_space<vmem>>, %arg11: memref<1x16xf32, #tpu.memory_space<vmem>>, %arg12: memref<16x1xbf16, #tpu.memory_space<vmem>>, %arg13: memref<1x1xf32, #tpu.memory_space<vmem>>, %arg14: memref<16x1xf32, #tpu.memory_space<vmem>>, %arg15: memref<8x32xf32, #tpu.memory_space<vmem>>) attributes {dimension_semantics = [#tpu.dimension_semantics<arbitrary>], iteration_bounds = array<i64: 1>, scalar_prefetch = 0 : i64, scratch_operands = 0 : i64, tpu.core_type = #tpu.core_type<tc>, window_params = [{pipeline_mode = #tpu.pipeline_mode<synchronous>, transform_indices = @transform_0, window_bounds = array<i64: 16, 16>}, {pipeline_mode = #tpu.pipeline_mode<synchronous>, transform_indices = @transform_1, window_bounds = array<i64: 16, 192>}, {pipeline_mode = #tpu.pipeline_mode<synchronous>, transform_indices = @transform_2, window_bounds = array<i64: 1, 192>}, {pipeline_mode = #tpu.pipeline_mode<synchronous>, transform_indices = @transform_3, window_bounds = array<i64: 64, 192>}, {pipeline_mode = #tpu.pipeline_mode<synchronous>, transform_indices = @transform_4, window_bounds = array<i64: 1, 64>}, {pipeline_mode = #tpu.pipeline_mode<synchronous>, transform_indices = @transform_5, window_bounds = array<i64: 64, 192>}, {pipeline_mode = #tpu.pipeline_mode<synchronous>, transform_indices = @transform_6, window_bounds = array<i64: 1, 192>}, {pipeline_mode = #tpu.pipeline_mode<synchronous>, transform_indices = @transform_7, window_bounds = array<i64: 64, 192>}, {pipeline_mode = #tpu.pipeline_mode<synchronous>, transform_indices = @transform_8, window_bounds = array<i64: 1, 64>}, {pipeline_mode = #tpu.pipeline_mode<synchronous>, transform_indices = @transform_9, window_bounds = array<i64: 64, 16>}, {pipeline_mode = #tpu.pipeline_mode<synchronous>, transform_indices = @transform_10, window_bounds = array<i64: 1, 16>}, {pipeline_mode = #tpu.pipeline_mode<synchronous>, transform_indices = @transform_11, window_bounds = array<i64: 16, 1>}, {pipeline_mode = #tpu.pipeline_mode<synchronous>, transform_indices = @transform_12, window_bounds = array<i64: 1, 1>}, {pipeline_mode = #tpu.pipeline_mode<synchronous>, transform_indices = @transform_13, window_bounds = array<i64: 16, 1>}, {pipeline_mode = #tpu.pipeline_mode<synchronous>, transform_indices = @transform_14, window_bounds = array<i64: 8, 32>}]} {
    %c0 = arith.constant 0 : index
    %c0_0 = arith.constant 0 : index
    %0 = vector.load %arg1[%c0, %c0_0] : memref<16x16xbf16, #tpu.memory_space<vmem>>, vector<16x16xbf16>
    %c0_1 = arith.constant 0 : index
    %c0_2 = arith.constant 0 : index
    %1 = vector.load %arg2[%c0_1, %c0_2] : memref<16x192xbf16, #tpu.memory_space<vmem>>, vector<16x192xbf16>
    %c0_3 = arith.constant 0 : index
    %c0_4 = arith.constant 0 : index
    %2 = vector.load %arg3[%c0_3, %c0_4] : memref<1x192xf32, #tpu.memory_space<vmem>>, vector<1x192xf32>
    %c0_5 = arith.constant 0 : index
    %c0_6 = arith.constant 0 : index
    %3 = vector.load %arg4[%c0_5, %c0_6] : memref<64x192xbf16, #tpu.memory_space<vmem>>, vector<64x192xbf16>
    %c0_7 = arith.constant 0 : index
    %c0_8 = arith.constant 0 : index
    %4 = vector.load %arg5[%c0_7, %c0_8] : memref<1x64xf32, #tpu.memory_space<vmem>>, vector<1x64xf32>
    %cst = arith.constant dense<0.000000e+00> : vector<16x192xf32>
    %5 = tpu.matmul %0, %1, %cst {dimension_numbers = #tpu.dot_dimension_numbers<[1], [0], [0], [1], [0, 0, 1, 1], [], []>} : vector<16x16xbf16>, vector<16x192xbf16>, vector<16x192xf32> -> vector<16x192xf32>
    %6 = vector.broadcast %2 : vector<1x192xf32> to vector<16x192xf32>
    %7 = arith.addf %5, %6 : vector<16x192xf32>
    %8 = tpu.iota {dimensions = array<i32: 1>} : vector<1x192xi32>
    %c64_i32 = arith.constant 64 : i32
    %c0_i32 = arith.constant 0 : i32
    %9 = arith.cmpi eq, %c64_i32, %c0_i32 : i32
    %c1_i32 = arith.constant 1 : i32
    %10 = arith.select %9, %c1_i32, %c64_i32 : i32
    %11 = vector.broadcast %10 : i32 to vector<1x192xi32>
    %12 = arith.remsi %8, %11 : vector<1x192xi32>
    %c0_i32_9 = arith.constant 0 : i32
    %13 = vector.broadcast %c0_i32_9 : i32 to vector<1x192xi32>
    %14 = arith.cmpi ne, %12, %13 : vector<1x192xi32>
    %c0_i32_10 = arith.constant 0 : i32
    %15 = vector.broadcast %c0_i32_10 : i32 to vector<1x192xi32>
    %16 = arith.cmpi slt, %12, %15 : vector<1x192xi32>
    %c0_i32_11 = arith.constant 0 : i32
    %17 = arith.cmpi slt, %10, %c0_i32_11 : i32
    %18 = vector.broadcast %17 : i1 to vector<1x192xi1>
    %19 = vector.broadcast %18 : vector<1x192xi1> to vector<1x192xi1>
    %20 = arith.xori %16, %19 : vector<1x192xi1>
    %21 = arith.andi %20, %14 : vector<1x192xi1>
    %22 = vector.broadcast %10 : i32 to vector<1x192xi32>
    %23 = arith.addi %12, %22 : vector<1x192xi32>
    %24 = arith.select %21, %23, %12 : vector<1x192xi1>, vector<1x192xi32>
    %c32_i32 = arith.constant 32 : i32
    %25 = vector.broadcast %c32_i32 : i32 to vector<1x192xi32>
    %26 = arith.cmpi slt, %24, %25 : vector<1x192xi32>
    %cst_12 = arith.constant 0.000000e+00 : f32
    %27 = vector.broadcast %cst_12 : f32 to vector<2x64xf32>
    %28 = vector.extract_strided_slice %7 {offsets = [0, 0], sizes = [2, 192], strides = [1, 1]} : vector<16x192xf32> to vector<2x192xf32>
    %29 = vector.extract_strided_slice %7 {offsets = [14, 0], sizes = [2, 192], strides = [1, 1]} : vector<16x192xf32> to vector<2x192xf32>
    %30 = vector.shape_cast %26 : vector<1x192xi1> to vector<1x192xi1>
    %31 = vector.broadcast %30 : vector<1x192xi1> to vector<2x192xi1>
    %32 = arith.select %31, %28, %29 : vector<2x192xi1>, vector<2x192xf32>
    %33 = arith.truncf %27 : vector<2x64xf32> to vector<2x64xbf16>
    %cst_13 = arith.constant dense<0.000000e+00> : vector<2x192xf32>
    %34 = tpu.matmul %33, %3, %cst_13 {dimension_numbers = #tpu.dot_dimension_numbers<[1], [0], [0], [1], [0, 0, 1, 1], [], []>} : vector<2x64xbf16>, vector<64x192xbf16>, vector<2x192xf32> -> vector<2x192xf32>
    %35 = vector.extract_strided_slice %32 {offsets = [0, 0], sizes = [2, 128], strides = [1, 1]} : vector<2x192xf32> to vector<2x128xf32>
    %36 = vector.extract_strided_slice %34 {offsets = [0, 0], sizes = [2, 128], strides = [1, 1]} : vector<2x192xf32> to vector<2x128xf32>
    %37 = arith.addf %35, %36 : vector<2x128xf32>
    %38 = arith.negf %37 : vector<2x128xf32>
    %39 = math.exp %38 : vector<2x128xf32>
    %cst_14 = arith.constant 1.000000e+00 : f32
    %40 = vector.broadcast %cst_14 : f32 to vector<2x128xf32>
    %41 = arith.addf %40, %39 : vector<2x128xf32>
    %42 = arith.divf %40, %41 : vector<2x128xf32>
    %43 = vector.extract_strided_slice %42 {offsets = [0, 0], sizes = [2, 64], strides = [1, 1]} : vector<2x128xf32> to vector<2x64xf32>
    %44 = vector.extract_strided_slice %42 {offsets = [0, 64], sizes = [2, 64], strides = [1, 1]} : vector<2x128xf32> to vector<2x64xf32>
    %45 = vector.extract_strided_slice %32 {offsets = [0, 128], sizes = [2, 64], strides = [1, 1]} : vector<2x192xf32> to vector<2x64xf32>
    %46 = vector.extract_strided_slice %34 {offsets = [0, 128], sizes = [2, 64], strides = [1, 1]} : vector<2x192xf32> to vector<2x64xf32>
    %47 = vector.broadcast %4 : vector<1x64xf32> to vector<2x64xf32>
    %48 = arith.addf %46, %47 : vector<2x64xf32>
    %49 = arith.mulf %43, %48 : vector<2x64xf32>
    %50 = arith.addf %45, %49 : vector<2x64xf32>
    %51 = math.tanh %50 : vector<2x64xf32>
    %cst_15 = arith.constant 1.000000e+00 : f32
    %52 = vector.broadcast %cst_15 : f32 to vector<2x64xf32>
    %53 = arith.subf %52, %44 : vector<2x64xf32>
    %54 = arith.mulf %53, %51 : vector<2x64xf32>
    %55 = arith.mulf %44, %27 : vector<2x64xf32>
    %56 = arith.addf %54, %55 : vector<2x64xf32>
    %57 = vector.extract_strided_slice %7 {offsets = [2, 0], sizes = [2, 192], strides = [1, 1]} : vector<16x192xf32> to vector<2x192xf32>
    %58 = vector.extract_strided_slice %7 {offsets = [12, 0], sizes = [2, 192], strides = [1, 1]} : vector<16x192xf32> to vector<2x192xf32>
    %59 = vector.shape_cast %26 : vector<1x192xi1> to vector<1x192xi1>
    %60 = vector.broadcast %59 : vector<1x192xi1> to vector<2x192xi1>
    %61 = arith.select %60, %57, %58 : vector<2x192xi1>, vector<2x192xf32>
    %62 = arith.truncf %56 : vector<2x64xf32> to vector<2x64xbf16>
    %cst_16 = arith.constant dense<0.000000e+00> : vector<2x192xf32>
    %63 = tpu.matmul %62, %3, %cst_16 {dimension_numbers = #tpu.dot_dimension_numbers<[1], [0], [0], [1], [0, 0, 1, 1], [], []>} : vector<2x64xbf16>, vector<64x192xbf16>, vector<2x192xf32> -> vector<2x192xf32>
    %64 = vector.extract_strided_slice %61 {offsets = [0, 0], sizes = [2, 128], strides = [1, 1]} : vector<2x192xf32> to vector<2x128xf32>
    %65 = vector.extract_strided_slice %63 {offsets = [0, 0], sizes = [2, 128], strides = [1, 1]} : vector<2x192xf32> to vector<2x128xf32>
    %66 = arith.addf %64, %65 : vector<2x128xf32>
    %67 = arith.negf %66 : vector<2x128xf32>
    %68 = math.exp %67 : vector<2x128xf32>
    %cst_17 = arith.constant 1.000000e+00 : f32
    %69 = vector.broadcast %cst_17 : f32 to vector<2x128xf32>
    %70 = arith.addf %69, %68 : vector<2x128xf32>
    %71 = arith.divf %69, %70 : vector<2x128xf32>
    %72 = vector.extract_strided_slice %71 {offsets = [0, 0], sizes = [2, 64], strides = [1, 1]} : vector<2x128xf32> to vector<2x64xf32>
    %73 = vector.extract_strided_slice %71 {offsets = [0, 64], sizes = [2, 64], strides = [1, 1]} : vector<2x128xf32> to vector<2x64xf32>
    %74 = vector.extract_strided_slice %61 {offsets = [0, 128], sizes = [2, 64], strides = [1, 1]} : vector<2x192xf32> to vector<2x64xf32>
    %75 = vector.extract_strided_slice %63 {offsets = [0, 128], sizes = [2, 64], strides = [1, 1]} : vector<2x192xf32> to vector<2x64xf32>
    %76 = vector.broadcast %4 : vector<1x64xf32> to vector<2x64xf32>
    %77 = arith.addf %75, %76 : vector<2x64xf32>
    %78 = arith.mulf %72, %77 : vector<2x64xf32>
    %79 = arith.addf %74, %78 : vector<2x64xf32>
    %80 = math.tanh %79 : vector<2x64xf32>
    %cst_18 = arith.constant 1.000000e+00 : f32
    %81 = vector.broadcast %cst_18 : f32 to vector<2x64xf32>
    %82 = arith.subf %81, %73 : vector<2x64xf32>
    %83 = arith.mulf %82, %80 : vector<2x64xf32>
    %84 = arith.mulf %73, %56 : vector<2x64xf32>
    %85 = arith.addf %83, %84 : vector<2x64xf32>
    %86 = vector.extract_strided_slice %7 {offsets = [4, 0], sizes = [2, 192], strides = [1, 1]} : vector<16x192xf32> to vector<2x192xf32>
    %87 = vector.extract_strided_slice %7 {offsets = [10, 0], sizes = [2, 192], strides = [1, 1]} : vector<16x192xf32> to vector<2x192xf32>
    %88 = vector.shape_cast %26 : vector<1x192xi1> to vector<1x192xi1>
    %89 = vector.broadcast %88 : vector<1x192xi1> to vector<2x192xi1>
    %90 = arith.select %89, %86, %87 : vector<2x192xi1>, vector<2x192xf32>
    %91 = arith.truncf %85 : vector<2x64xf32> to vector<2x64xbf16>
    %cst_19 = arith.constant dense<0.000000e+00> : vector<2x192xf32>
    %92 = tpu.matmul %91, %3, %cst_19 {dimension_numbers = #tpu.dot_dimension_numbers<[1], [0], [0], [1], [0, 0, 1, 1], [], []>} : vector<2x64xbf16>, vector<64x192xbf16>, vector<2x192xf32> -> vector<2x192xf32>
    %93 = vector.extract_strided_slice %90 {offsets = [0, 0], sizes = [2, 128], strides = [1, 1]} : vector<2x192xf32> to vector<2x128xf32>
    %94 = vector.extract_strided_slice %92 {offsets = [0, 0], sizes = [2, 128], strides = [1, 1]} : vector<2x192xf32> to vector<2x128xf32>
    %95 = arith.addf %93, %94 : vector<2x128xf32>
    %96 = arith.negf %95 : vector<2x128xf32>
    %97 = math.exp %96 : vector<2x128xf32>
    %cst_20 = arith.constant 1.000000e+00 : f32
    %98 = vector.broadcast %cst_20 : f32 to vector<2x128xf32>
    %99 = arith.addf %98, %97 : vector<2x128xf32>
    %100 = arith.divf %98, %99 : vector<2x128xf32>
    %101 = vector.extract_strided_slice %100 {offsets = [0, 0], sizes = [2, 64], strides = [1, 1]} : vector<2x128xf32> to vector<2x64xf32>
    %102 = vector.extract_strided_slice %100 {offsets = [0, 64], sizes = [2, 64], strides = [1, 1]} : vector<2x128xf32> to vector<2x64xf32>
    %103 = vector.extract_strided_slice %90 {offsets = [0, 128], sizes = [2, 64], strides = [1, 1]} : vector<2x192xf32> to vector<2x64xf32>
    %104 = vector.extract_strided_slice %92 {offsets = [0, 128], sizes = [2, 64], strides = [1, 1]} : vector<2x192xf32> to vector<2x64xf32>
    %105 = vector.broadcast %4 : vector<1x64xf32> to vector<2x64xf32>
    %106 = arith.addf %104, %105 : vector<2x64xf32>
    %107 = arith.mulf %101, %106 : vector<2x64xf32>
    %108 = arith.addf %103, %107 : vector<2x64xf32>
    %109 = math.tanh %108 : vector<2x64xf32>
    %cst_21 = arith.constant 1.000000e+00 : f32
    %110 = vector.broadcast %cst_21 : f32 to vector<2x64xf32>
    %111 = arith.subf %110, %102 : vector<2x64xf32>
    %112 = arith.mulf %111, %109 : vector<2x64xf32>
    %113 = arith.mulf %102, %85 : vector<2x64xf32>
    %114 = arith.addf %112, %113 : vector<2x64xf32>
    %115 = vector.extract_strided_slice %7 {offsets = [6, 0], sizes = [2, 192], strides = [1, 1]} : vector<16x192xf32> to vector<2x192xf32>
    %116 = vector.extract_strided_slice %7 {offsets = [8, 0], sizes = [2, 192], strides = [1, 1]} : vector<16x192xf32> to vector<2x192xf32>
    %117 = vector.shape_cast %26 : vector<1x192xi1> to vector<1x192xi1>
    %118 = vector.broadcast %117 : vector<1x192xi1> to vector<2x192xi1>
    %119 = arith.select %118, %115, %116 : vector<2x192xi1>, vector<2x192xf32>
    %120 = arith.truncf %114 : vector<2x64xf32> to vector<2x64xbf16>
    %cst_22 = arith.constant dense<0.000000e+00> : vector<2x192xf32>
    %121 = tpu.matmul %120, %3, %cst_22 {dimension_numbers = #tpu.dot_dimension_numbers<[1], [0], [0], [1], [0, 0, 1, 1], [], []>} : vector<2x64xbf16>, vector<64x192xbf16>, vector<2x192xf32> -> vector<2x192xf32>
    %122 = vector.extract_strided_slice %119 {offsets = [0, 0], sizes = [2, 128], strides = [1, 1]} : vector<2x192xf32> to vector<2x128xf32>
    %123 = vector.extract_strided_slice %121 {offsets = [0, 0], sizes = [2, 128], strides = [1, 1]} : vector<2x192xf32> to vector<2x128xf32>
    %124 = arith.addf %122, %123 : vector<2x128xf32>
    %125 = arith.negf %124 : vector<2x128xf32>
    %126 = math.exp %125 : vector<2x128xf32>
    %cst_23 = arith.constant 1.000000e+00 : f32
    %127 = vector.broadcast %cst_23 : f32 to vector<2x128xf32>
    %128 = arith.addf %127, %126 : vector<2x128xf32>
    %129 = arith.divf %127, %128 : vector<2x128xf32>
    %130 = vector.extract_strided_slice %129 {offsets = [0, 0], sizes = [2, 64], strides = [1, 1]} : vector<2x128xf32> to vector<2x64xf32>
    %131 = vector.extract_strided_slice %129 {offsets = [0, 64], sizes = [2, 64], strides = [1, 1]} : vector<2x128xf32> to vector<2x64xf32>
    %132 = vector.extract_strided_slice %119 {offsets = [0, 128], sizes = [2, 64], strides = [1, 1]} : vector<2x192xf32> to vector<2x64xf32>
    %133 = vector.extract_strided_slice %121 {offsets = [0, 128], sizes = [2, 64], strides = [1, 1]} : vector<2x192xf32> to vector<2x64xf32>
    %134 = vector.broadcast %4 : vector<1x64xf32> to vector<2x64xf32>
    %135 = arith.addf %133, %134 : vector<2x64xf32>
    %136 = arith.mulf %130, %135 : vector<2x64xf32>
    %137 = arith.addf %132, %136 : vector<2x64xf32>
    %138 = math.tanh %137 : vector<2x64xf32>
    %cst_24 = arith.constant 1.000000e+00 : f32
    %139 = vector.broadcast %cst_24 : f32 to vector<2x64xf32>
    %140 = arith.subf %139, %131 : vector<2x64xf32>
    %141 = arith.mulf %140, %138 : vector<2x64xf32>
    %142 = arith.mulf %131, %114 : vector<2x64xf32>
    %143 = arith.addf %141, %142 : vector<2x64xf32>
    %144 = vector.extract_strided_slice %7 {offsets = [8, 0], sizes = [2, 192], strides = [1, 1]} : vector<16x192xf32> to vector<2x192xf32>
    %145 = vector.extract_strided_slice %7 {offsets = [6, 0], sizes = [2, 192], strides = [1, 1]} : vector<16x192xf32> to vector<2x192xf32>
    %146 = vector.shape_cast %26 : vector<1x192xi1> to vector<1x192xi1>
    %147 = vector.broadcast %146 : vector<1x192xi1> to vector<2x192xi1>
    %148 = arith.select %147, %144, %145 : vector<2x192xi1>, vector<2x192xf32>
    %149 = arith.truncf %143 : vector<2x64xf32> to vector<2x64xbf16>
    %cst_25 = arith.constant dense<0.000000e+00> : vector<2x192xf32>
    %150 = tpu.matmul %149, %3, %cst_25 {dimension_numbers = #tpu.dot_dimension_numbers<[1], [0], [0], [1], [0, 0, 1, 1], [], []>} : vector<2x64xbf16>, vector<64x192xbf16>, vector<2x192xf32> -> vector<2x192xf32>
    %151 = vector.extract_strided_slice %148 {offsets = [0, 0], sizes = [2, 128], strides = [1, 1]} : vector<2x192xf32> to vector<2x128xf32>
    %152 = vector.extract_strided_slice %150 {offsets = [0, 0], sizes = [2, 128], strides = [1, 1]} : vector<2x192xf32> to vector<2x128xf32>
    %153 = arith.addf %151, %152 : vector<2x128xf32>
    %154 = arith.negf %153 : vector<2x128xf32>
    %155 = math.exp %154 : vector<2x128xf32>
    %cst_26 = arith.constant 1.000000e+00 : f32
    %156 = vector.broadcast %cst_26 : f32 to vector<2x128xf32>
    %157 = arith.addf %156, %155 : vector<2x128xf32>
    %158 = arith.divf %156, %157 : vector<2x128xf32>
    %159 = vector.extract_strided_slice %158 {offsets = [0, 0], sizes = [2, 64], strides = [1, 1]} : vector<2x128xf32> to vector<2x64xf32>
    %160 = vector.extract_strided_slice %158 {offsets = [0, 64], sizes = [2, 64], strides = [1, 1]} : vector<2x128xf32> to vector<2x64xf32>
    %161 = vector.extract_strided_slice %148 {offsets = [0, 128], sizes = [2, 64], strides = [1, 1]} : vector<2x192xf32> to vector<2x64xf32>
    %162 = vector.extract_strided_slice %150 {offsets = [0, 128], sizes = [2, 64], strides = [1, 1]} : vector<2x192xf32> to vector<2x64xf32>
    %163 = vector.broadcast %4 : vector<1x64xf32> to vector<2x64xf32>
    %164 = arith.addf %162, %163 : vector<2x64xf32>
    %165 = arith.mulf %159, %164 : vector<2x64xf32>
    %166 = arith.addf %161, %165 : vector<2x64xf32>
    %167 = math.tanh %166 : vector<2x64xf32>
    %cst_27 = arith.constant 1.000000e+00 : f32
    %168 = vector.broadcast %cst_27 : f32 to vector<2x64xf32>
    %169 = arith.subf %168, %160 : vector<2x64xf32>
    %170 = arith.mulf %169, %167 : vector<2x64xf32>
    %171 = arith.mulf %160, %143 : vector<2x64xf32>
    %172 = arith.addf %170, %171 : vector<2x64xf32>
    %173 = vector.extract_strided_slice %7 {offsets = [10, 0], sizes = [2, 192], strides = [1, 1]} : vector<16x192xf32> to vector<2x192xf32>
    %174 = vector.extract_strided_slice %7 {offsets = [4, 0], sizes = [2, 192], strides = [1, 1]} : vector<16x192xf32> to vector<2x192xf32>
    %175 = vector.shape_cast %26 : vector<1x192xi1> to vector<1x192xi1>
    %176 = vector.broadcast %175 : vector<1x192xi1> to vector<2x192xi1>
    %177 = arith.select %176, %173, %174 : vector<2x192xi1>, vector<2x192xf32>
    %178 = arith.truncf %172 : vector<2x64xf32> to vector<2x64xbf16>
    %cst_28 = arith.constant dense<0.000000e+00> : vector<2x192xf32>
    %179 = tpu.matmul %178, %3, %cst_28 {dimension_numbers = #tpu.dot_dimension_numbers<[1], [0], [0], [1], [0, 0, 1, 1], [], []>} : vector<2x64xbf16>, vector<64x192xbf16>, vector<2x192xf32> -> vector<2x192xf32>
    %180 = vector.extract_strided_slice %177 {offsets = [0, 0], sizes = [2, 128], strides = [1, 1]} : vector<2x192xf32> to vector<2x128xf32>
    %181 = vector.extract_strided_slice %179 {offsets = [0, 0], sizes = [2, 128], strides = [1, 1]} : vector<2x192xf32> to vector<2x128xf32>
    %182 = arith.addf %180, %181 : vector<2x128xf32>
    %183 = arith.negf %182 : vector<2x128xf32>
    %184 = math.exp %183 : vector<2x128xf32>
    %cst_29 = arith.constant 1.000000e+00 : f32
    %185 = vector.broadcast %cst_29 : f32 to vector<2x128xf32>
    %186 = arith.addf %185, %184 : vector<2x128xf32>
    %187 = arith.divf %185, %186 : vector<2x128xf32>
    %188 = vector.extract_strided_slice %187 {offsets = [0, 0], sizes = [2, 64], strides = [1, 1]} : vector<2x128xf32> to vector<2x64xf32>
    %189 = vector.extract_strided_slice %187 {offsets = [0, 64], sizes = [2, 64], strides = [1, 1]} : vector<2x128xf32> to vector<2x64xf32>
    %190 = vector.extract_strided_slice %177 {offsets = [0, 128], sizes = [2, 64], strides = [1, 1]} : vector<2x192xf32> to vector<2x64xf32>
    %191 = vector.extract_strided_slice %179 {offsets = [0, 128], sizes = [2, 64], strides = [1, 1]} : vector<2x192xf32> to vector<2x64xf32>
    %192 = vector.broadcast %4 : vector<1x64xf32> to vector<2x64xf32>
    %193 = arith.addf %191, %192 : vector<2x64xf32>
    %194 = arith.mulf %188, %193 : vector<2x64xf32>
    %195 = arith.addf %190, %194 : vector<2x64xf32>
    %196 = math.tanh %195 : vector<2x64xf32>
    %cst_30 = arith.constant 1.000000e+00 : f32
    %197 = vector.broadcast %cst_30 : f32 to vector<2x64xf32>
    %198 = arith.subf %197, %189 : vector<2x64xf32>
    %199 = arith.mulf %198, %196 : vector<2x64xf32>
    %200 = arith.mulf %189, %172 : vector<2x64xf32>
    %201 = arith.addf %199, %200 : vector<2x64xf32>
    %202 = vector.extract_strided_slice %7 {offsets = [12, 0], sizes = [2, 192], strides = [1, 1]} : vector<16x192xf32> to vector<2x192xf32>
    %203 = vector.extract_strided_slice %7 {offsets = [2, 0], sizes = [2, 192], strides = [1, 1]} : vector<16x192xf32> to vector<2x192xf32>
    %204 = vector.shape_cast %26 : vector<1x192xi1> to vector<1x192xi1>
    %205 = vector.broadcast %204 : vector<1x192xi1> to vector<2x192xi1>
    %206 = arith.select %205, %202, %203 : vector<2x192xi1>, vector<2x192xf32>
    %207 = arith.truncf %201 : vector<2x64xf32> to vector<2x64xbf16>
    %cst_31 = arith.constant dense<0.000000e+00> : vector<2x192xf32>
    %208 = tpu.matmul %207, %3, %cst_31 {dimension_numbers = #tpu.dot_dimension_numbers<[1], [0], [0], [1], [0, 0, 1, 1], [], []>} : vector<2x64xbf16>, vector<64x192xbf16>, vector<2x192xf32> -> vector<2x192xf32>
    %209 = vector.extract_strided_slice %206 {offsets = [0, 0], sizes = [2, 128], strides = [1, 1]} : vector<2x192xf32> to vector<2x128xf32>
    %210 = vector.extract_strided_slice %208 {offsets = [0, 0], sizes = [2, 128], strides = [1, 1]} : vector<2x192xf32> to vector<2x128xf32>
    %211 = arith.addf %209, %210 : vector<2x128xf32>
    %212 = arith.negf %211 : vector<2x128xf32>
    %213 = math.exp %212 : vector<2x128xf32>
    %cst_32 = arith.constant 1.000000e+00 : f32
    %214 = vector.broadcast %cst_32 : f32 to vector<2x128xf32>
    %215 = arith.addf %214, %213 : vector<2x128xf32>
    %216 = arith.divf %214, %215 : vector<2x128xf32>
    %217 = vector.extract_strided_slice %216 {offsets = [0, 0], sizes = [2, 64], strides = [1, 1]} : vector<2x128xf32> to vector<2x64xf32>
    %218 = vector.extract_strided_slice %216 {offsets = [0, 64], sizes = [2, 64], strides = [1, 1]} : vector<2x128xf32> to vector<2x64xf32>
    %219 = vector.extract_strided_slice %206 {offsets = [0, 128], sizes = [2, 64], strides = [1, 1]} : vector<2x192xf32> to vector<2x64xf32>
    %220 = vector.extract_strided_slice %208 {offsets = [0, 128], sizes = [2, 64], strides = [1, 1]} : vector<2x192xf32> to vector<2x64xf32>
    %221 = vector.broadcast %4 : vector<1x64xf32> to vector<2x64xf32>
    %222 = arith.addf %220, %221 : vector<2x64xf32>
    %223 = arith.mulf %217, %222 : vector<2x64xf32>
    %224 = arith.addf %219, %223 : vector<2x64xf32>
    %225 = math.tanh %224 : vector<2x64xf32>
    %cst_33 = arith.constant 1.000000e+00 : f32
    %226 = vector.broadcast %cst_33 : f32 to vector<2x64xf32>
    %227 = arith.subf %226, %218 : vector<2x64xf32>
    %228 = arith.mulf %227, %225 : vector<2x64xf32>
    %229 = arith.mulf %218, %201 : vector<2x64xf32>
    %230 = arith.addf %228, %229 : vector<2x64xf32>
    %231 = vector.extract_strided_slice %7 {offsets = [14, 0], sizes = [2, 192], strides = [1, 1]} : vector<16x192xf32> to vector<2x192xf32>
    %232 = vector.extract_strided_slice %7 {offsets = [0, 0], sizes = [2, 192], strides = [1, 1]} : vector<16x192xf32> to vector<2x192xf32>
    %233 = vector.shape_cast %26 : vector<1x192xi1> to vector<1x192xi1>
    %234 = vector.broadcast %233 : vector<1x192xi1> to vector<2x192xi1>
    %235 = arith.select %234, %231, %232 : vector<2x192xi1>, vector<2x192xf32>
    %236 = arith.truncf %230 : vector<2x64xf32> to vector<2x64xbf16>
    %cst_34 = arith.constant dense<0.000000e+00> : vector<2x192xf32>
    %237 = tpu.matmul %236, %3, %cst_34 {dimension_numbers = #tpu.dot_dimension_numbers<[1], [0], [0], [1], [0, 0, 1, 1], [], []>} : vector<2x64xbf16>, vector<64x192xbf16>, vector<2x192xf32> -> vector<2x192xf32>
    %238 = vector.extract_strided_slice %235 {offsets = [0, 0], sizes = [2, 128], strides = [1, 1]} : vector<2x192xf32> to vector<2x128xf32>
    %239 = vector.extract_strided_slice %237 {offsets = [0, 0], sizes = [2, 128], strides = [1, 1]} : vector<2x192xf32> to vector<2x128xf32>
    %240 = arith.addf %238, %239 : vector<2x128xf32>
    %241 = arith.negf %240 : vector<2x128xf32>
    %242 = math.exp %241 : vector<2x128xf32>
    %cst_35 = arith.constant 1.000000e+00 : f32
    %243 = vector.broadcast %cst_35 : f32 to vector<2x128xf32>
    %244 = arith.addf %243, %242 : vector<2x128xf32>
    %245 = arith.divf %243, %244 : vector<2x128xf32>
    %246 = vector.extract_strided_slice %245 {offsets = [0, 0], sizes = [2, 64], strides = [1, 1]} : vector<2x128xf32> to vector<2x64xf32>
    %247 = vector.extract_strided_slice %245 {offsets = [0, 64], sizes = [2, 64], strides = [1, 1]} : vector<2x128xf32> to vector<2x64xf32>
    %248 = vector.extract_strided_slice %235 {offsets = [0, 128], sizes = [2, 64], strides = [1, 1]} : vector<2x192xf32> to vector<2x64xf32>
    %249 = vector.extract_strided_slice %237 {offsets = [0, 128], sizes = [2, 64], strides = [1, 1]} : vector<2x192xf32> to vector<2x64xf32>
    %250 = vector.broadcast %4 : vector<1x64xf32> to vector<2x64xf32>
    %251 = arith.addf %249, %250 : vector<2x64xf32>
    %252 = arith.mulf %246, %251 : vector<2x64xf32>
    %253 = arith.addf %248, %252 : vector<2x64xf32>
    %254 = math.tanh %253 : vector<2x64xf32>
    %cst_36 = arith.constant 1.000000e+00 : f32
    %255 = vector.broadcast %cst_36 : f32 to vector<2x64xf32>
    %256 = arith.subf %255, %247 : vector<2x64xf32>
    %257 = arith.mulf %256, %254 : vector<2x64xf32>
    %258 = arith.mulf %247, %230 : vector<2x64xf32>
    %259 = arith.addf %257, %258 : vector<2x64xf32>
    %260 = vector.extract_strided_slice %56 {offsets = [0, 0], sizes = [2, 32], strides = [1, 1]} : vector<2x64xf32> to vector<2x32xf32>
    %261 = vector.extract_strided_slice %85 {offsets = [0, 0], sizes = [2, 32], strides = [1, 1]} : vector<2x64xf32> to vector<2x32xf32>
    %262 = vector.extract_strided_slice %114 {offsets = [0, 0], sizes = [2, 32], strides = [1, 1]} : vector<2x64xf32> to vector<2x32xf32>
    %263 = vector.extract_strided_slice %143 {offsets = [0, 0], sizes = [2, 32], strides = [1, 1]} : vector<2x64xf32> to vector<2x32xf32>
    %264 = vector.extract_strided_slice %172 {offsets = [0, 0], sizes = [2, 32], strides = [1, 1]} : vector<2x64xf32> to vector<2x32xf32>
    %265 = vector.extract_strided_slice %201 {offsets = [0, 0], sizes = [2, 32], strides = [1, 1]} : vector<2x64xf32> to vector<2x32xf32>
    %266 = vector.extract_strided_slice %230 {offsets = [0, 0], sizes = [2, 32], strides = [1, 1]} : vector<2x64xf32> to vector<2x32xf32>
    %267 = vector.extract_strided_slice %259 {offsets = [0, 0], sizes = [2, 32], strides = [1, 1]} : vector<2x64xf32> to vector<2x32xf32>
    %268 = tpu.concatenate %260, %261, %262, %263, %264, %265, %266, %267 in 0 : vector<2x32xf32>, vector<2x32xf32>, vector<2x32xf32>, vector<2x32xf32>, vector<2x32xf32>, vector<2x32xf32>, vector<2x32xf32>, vector<2x32xf32> -> vector<16x32xf32>
    %269 = vector.extract_strided_slice %259 {offsets = [0, 32], sizes = [2, 32], strides = [1, 1]} : vector<2x64xf32> to vector<2x32xf32>
    %270 = vector.extract_strided_slice %230 {offsets = [0, 32], sizes = [2, 32], strides = [1, 1]} : vector<2x64xf32> to vector<2x32xf32>
    %271 = vector.extract_strided_slice %201 {offsets = [0, 32], sizes = [2, 32], strides = [1, 1]} : vector<2x64xf32> to vector<2x32xf32>
    %272 = vector.extract_strided_slice %172 {offsets = [0, 32], sizes = [2, 32], strides = [1, 1]} : vector<2x64xf32> to vector<2x32xf32>
    %273 = vector.extract_strided_slice %143 {offsets = [0, 32], sizes = [2, 32], strides = [1, 1]} : vector<2x64xf32> to vector<2x32xf32>
    %274 = vector.extract_strided_slice %114 {offsets = [0, 32], sizes = [2, 32], strides = [1, 1]} : vector<2x64xf32> to vector<2x32xf32>
    %275 = vector.extract_strided_slice %85 {offsets = [0, 32], sizes = [2, 32], strides = [1, 1]} : vector<2x64xf32> to vector<2x32xf32>
    %276 = vector.extract_strided_slice %56 {offsets = [0, 32], sizes = [2, 32], strides = [1, 1]} : vector<2x64xf32> to vector<2x32xf32>
    %277 = tpu.concatenate %269, %270, %271, %272, %273, %274, %275, %276 in 0 : vector<2x32xf32>, vector<2x32xf32>, vector<2x32xf32>, vector<2x32xf32>, vector<2x32xf32>, vector<2x32xf32>, vector<2x32xf32>, vector<2x32xf32> -> vector<16x32xf32>
    %278 = tpu.concatenate %268, %277 in 1 : vector<16x32xf32>, vector<16x32xf32> -> vector<16x64xf32>
    %279 = vector.extract_strided_slice %259 {offsets = [0, 0], sizes = [2, 32], strides = [1, 1]} : vector<2x64xf32> to vector<2x32xf32>
    %280 = vector.extract_strided_slice %259 {offsets = [0, 32], sizes = [2, 32], strides = [1, 1]} : vector<2x64xf32> to vector<2x32xf32>
    %281 = arith.truncf %278 : vector<16x64xf32> to vector<16x64xbf16>
    %c0_37 = arith.constant 0 : index
    %c0_38 = arith.constant 0 : index
    %282 = vector.load %arg6[%c0_37, %c0_38] : memref<64x192xbf16, #tpu.memory_space<vmem>>, vector<64x192xbf16>
    %c0_39 = arith.constant 0 : index
    %c0_40 = arith.constant 0 : index
    %283 = vector.load %arg7[%c0_39, %c0_40] : memref<1x192xf32, #tpu.memory_space<vmem>>, vector<1x192xf32>
    %c0_41 = arith.constant 0 : index
    %c0_42 = arith.constant 0 : index
    %284 = vector.load %arg8[%c0_41, %c0_42] : memref<64x192xbf16, #tpu.memory_space<vmem>>, vector<64x192xbf16>
    %c0_43 = arith.constant 0 : index
    %c0_44 = arith.constant 0 : index
    %285 = vector.load %arg9[%c0_43, %c0_44] : memref<1x64xf32, #tpu.memory_space<vmem>>, vector<1x64xf32>
    %cst_45 = arith.constant dense<0.000000e+00> : vector<16x192xf32>
    %286 = tpu.matmul %281, %282, %cst_45 {dimension_numbers = #tpu.dot_dimension_numbers<[1], [0], [0], [1], [0, 0, 1, 1], [], []>} : vector<16x64xbf16>, vector<64x192xbf16>, vector<16x192xf32> -> vector<16x192xf32>
    %287 = vector.broadcast %283 : vector<1x192xf32> to vector<16x192xf32>
    %288 = arith.addf %286, %287 : vector<16x192xf32>
    %289 = tpu.iota {dimensions = array<i32: 1>} : vector<1x192xi32>
    %c64_i32_46 = arith.constant 64 : i32
    %c0_i32_47 = arith.constant 0 : i32
    %290 = arith.cmpi eq, %c64_i32_46, %c0_i32_47 : i32
    %c1_i32_48 = arith.constant 1 : i32
    %291 = arith.select %290, %c1_i32_48, %c64_i32_46 : i32
    %292 = vector.broadcast %291 : i32 to vector<1x192xi32>
    %293 = arith.remsi %289, %292 : vector<1x192xi32>
    %c0_i32_49 = arith.constant 0 : i32
    %294 = vector.broadcast %c0_i32_49 : i32 to vector<1x192xi32>
    %295 = arith.cmpi ne, %293, %294 : vector<1x192xi32>
    %c0_i32_50 = arith.constant 0 : i32
    %296 = vector.broadcast %c0_i32_50 : i32 to vector<1x192xi32>
    %297 = arith.cmpi slt, %293, %296 : vector<1x192xi32>
    %c0_i32_51 = arith.constant 0 : i32
    %298 = arith.cmpi slt, %291, %c0_i32_51 : i32
    %299 = vector.broadcast %298 : i1 to vector<1x192xi1>
    %300 = vector.broadcast %299 : vector<1x192xi1> to vector<1x192xi1>
    %301 = arith.xori %297, %300 : vector<1x192xi1>
    %302 = arith.andi %301, %295 : vector<1x192xi1>
    %303 = vector.broadcast %291 : i32 to vector<1x192xi32>
    %304 = arith.addi %293, %303 : vector<1x192xi32>
    %305 = arith.select %302, %304, %293 : vector<1x192xi1>, vector<1x192xi32>
    %c32_i32_52 = arith.constant 32 : i32
    %306 = vector.broadcast %c32_i32_52 : i32 to vector<1x192xi32>
    %307 = arith.cmpi slt, %305, %306 : vector<1x192xi32>
    %cst_53 = arith.constant 0.000000e+00 : f32
    %308 = vector.broadcast %cst_53 : f32 to vector<2x64xf32>
    %309 = vector.extract_strided_slice %288 {offsets = [0, 0], sizes = [2, 192], strides = [1, 1]} : vector<16x192xf32> to vector<2x192xf32>
    %310 = vector.extract_strided_slice %288 {offsets = [14, 0], sizes = [2, 192], strides = [1, 1]} : vector<16x192xf32> to vector<2x192xf32>
    %311 = vector.shape_cast %307 : vector<1x192xi1> to vector<1x192xi1>
    %312 = vector.broadcast %311 : vector<1x192xi1> to vector<2x192xi1>
    %313 = arith.select %312, %309, %310 : vector<2x192xi1>, vector<2x192xf32>
    %314 = arith.truncf %308 : vector<2x64xf32> to vector<2x64xbf16>
    %cst_54 = arith.constant dense<0.000000e+00> : vector<2x192xf32>
    %315 = tpu.matmul %314, %284, %cst_54 {dimension_numbers = #tpu.dot_dimension_numbers<[1], [0], [0], [1], [0, 0, 1, 1], [], []>} : vector<2x64xbf16>, vector<64x192xbf16>, vector<2x192xf32> -> vector<2x192xf32>
    %316 = vector.extract_strided_slice %313 {offsets = [0, 0], sizes = [2, 128], strides = [1, 1]} : vector<2x192xf32> to vector<2x128xf32>
    %317 = vector.extract_strided_slice %315 {offsets = [0, 0], sizes = [2, 128], strides = [1, 1]} : vector<2x192xf32> to vector<2x128xf32>
    %318 = arith.addf %316, %317 : vector<2x128xf32>
    %319 = arith.negf %318 : vector<2x128xf32>
    %320 = math.exp %319 : vector<2x128xf32>
    %cst_55 = arith.constant 1.000000e+00 : f32
    %321 = vector.broadcast %cst_55 : f32 to vector<2x128xf32>
    %322 = arith.addf %321, %320 : vector<2x128xf32>
    %323 = arith.divf %321, %322 : vector<2x128xf32>
    %324 = vector.extract_strided_slice %323 {offsets = [0, 0], sizes = [2, 64], strides = [1, 1]} : vector<2x128xf32> to vector<2x64xf32>
    %325 = vector.extract_strided_slice %323 {offsets = [0, 64], sizes = [2, 64], strides = [1, 1]} : vector<2x128xf32> to vector<2x64xf32>
    %326 = vector.extract_strided_slice %313 {offsets = [0, 128], sizes = [2, 64], strides = [1, 1]} : vector<2x192xf32> to vector<2x64xf32>
    %327 = vector.extract_strided_slice %315 {offsets = [0, 128], sizes = [2, 64], strides = [1, 1]} : vector<2x192xf32> to vector<2x64xf32>
    %328 = vector.broadcast %285 : vector<1x64xf32> to vector<2x64xf32>
    %329 = arith.addf %327, %328 : vector<2x64xf32>
    %330 = arith.mulf %324, %329 : vector<2x64xf32>
    %331 = arith.addf %326, %330 : vector<2x64xf32>
    %332 = math.tanh %331 : vector<2x64xf32>
    %cst_56 = arith.constant 1.000000e+00 : f32
    %333 = vector.broadcast %cst_56 : f32 to vector<2x64xf32>
    %334 = arith.subf %333, %325 : vector<2x64xf32>
    %335 = arith.mulf %334, %332 : vector<2x64xf32>
    %336 = arith.mulf %325, %308 : vector<2x64xf32>
    %337 = arith.addf %335, %336 : vector<2x64xf32>
    %338 = vector.extract_strided_slice %288 {offsets = [2, 0], sizes = [2, 192], strides = [1, 1]} : vector<16x192xf32> to vector<2x192xf32>
    %339 = vector.extract_strided_slice %288 {offsets = [12, 0], sizes = [2, 192], strides = [1, 1]} : vector<16x192xf32> to vector<2x192xf32>
    %340 = vector.shape_cast %307 : vector<1x192xi1> to vector<1x192xi1>
    %341 = vector.broadcast %340 : vector<1x192xi1> to vector<2x192xi1>
    %342 = arith.select %341, %338, %339 : vector<2x192xi1>, vector<2x192xf32>
    %343 = arith.truncf %337 : vector<2x64xf32> to vector<2x64xbf16>
    %cst_57 = arith.constant dense<0.000000e+00> : vector<2x192xf32>
    %344 = tpu.matmul %343, %284, %cst_57 {dimension_numbers = #tpu.dot_dimension_numbers<[1], [0], [0], [1], [0, 0, 1, 1], [], []>} : vector<2x64xbf16>, vector<64x192xbf16>, vector<2x192xf32> -> vector<2x192xf32>
    %345 = vector.extract_strided_slice %342 {offsets = [0, 0], sizes = [2, 128], strides = [1, 1]} : vector<2x192xf32> to vector<2x128xf32>
    %346 = vector.extract_strided_slice %344 {offsets = [0, 0], sizes = [2, 128], strides = [1, 1]} : vector<2x192xf32> to vector<2x128xf32>
    %347 = arith.addf %345, %346 : vector<2x128xf32>
    %348 = arith.negf %347 : vector<2x128xf32>
    %349 = math.exp %348 : vector<2x128xf32>
    %cst_58 = arith.constant 1.000000e+00 : f32
    %350 = vector.broadcast %cst_58 : f32 to vector<2x128xf32>
    %351 = arith.addf %350, %349 : vector<2x128xf32>
    %352 = arith.divf %350, %351 : vector<2x128xf32>
    %353 = vector.extract_strided_slice %352 {offsets = [0, 0], sizes = [2, 64], strides = [1, 1]} : vector<2x128xf32> to vector<2x64xf32>
    %354 = vector.extract_strided_slice %352 {offsets = [0, 64], sizes = [2, 64], strides = [1, 1]} : vector<2x128xf32> to vector<2x64xf32>
    %355 = vector.extract_strided_slice %342 {offsets = [0, 128], sizes = [2, 64], strides = [1, 1]} : vector<2x192xf32> to vector<2x64xf32>
    %356 = vector.extract_strided_slice %344 {offsets = [0, 128], sizes = [2, 64], strides = [1, 1]} : vector<2x192xf32> to vector<2x64xf32>
    %357 = vector.broadcast %285 : vector<1x64xf32> to vector<2x64xf32>
    %358 = arith.addf %356, %357 : vector<2x64xf32>
    %359 = arith.mulf %353, %358 : vector<2x64xf32>
    %360 = arith.addf %355, %359 : vector<2x64xf32>
    %361 = math.tanh %360 : vector<2x64xf32>
    %cst_59 = arith.constant 1.000000e+00 : f32
    %362 = vector.broadcast %cst_59 : f32 to vector<2x64xf32>
    %363 = arith.subf %362, %354 : vector<2x64xf32>
    %364 = arith.mulf %363, %361 : vector<2x64xf32>
    %365 = arith.mulf %354, %337 : vector<2x64xf32>
    %366 = arith.addf %364, %365 : vector<2x64xf32>
    %367 = vector.extract_strided_slice %288 {offsets = [4, 0], sizes = [2, 192], strides = [1, 1]} : vector<16x192xf32> to vector<2x192xf32>
    %368 = vector.extract_strided_slice %288 {offsets = [10, 0], sizes = [2, 192], strides = [1, 1]} : vector<16x192xf32> to vector<2x192xf32>
    %369 = vector.shape_cast %307 : vector<1x192xi1> to vector<1x192xi1>
    %370 = vector.broadcast %369 : vector<1x192xi1> to vector<2x192xi1>
    %371 = arith.select %370, %367, %368 : vector<2x192xi1>, vector<2x192xf32>
    %372 = arith.truncf %366 : vector<2x64xf32> to vector<2x64xbf16>
    %cst_60 = arith.constant dense<0.000000e+00> : vector<2x192xf32>
    %373 = tpu.matmul %372, %284, %cst_60 {dimension_numbers = #tpu.dot_dimension_numbers<[1], [0], [0], [1], [0, 0, 1, 1], [], []>} : vector<2x64xbf16>, vector<64x192xbf16>, vector<2x192xf32> -> vector<2x192xf32>
    %374 = vector.extract_strided_slice %371 {offsets = [0, 0], sizes = [2, 128], strides = [1, 1]} : vector<2x192xf32> to vector<2x128xf32>
    %375 = vector.extract_strided_slice %373 {offsets = [0, 0], sizes = [2, 128], strides = [1, 1]} : vector<2x192xf32> to vector<2x128xf32>
    %376 = arith.addf %374, %375 : vector<2x128xf32>
    %377 = arith.negf %376 : vector<2x128xf32>
    %378 = math.exp %377 : vector<2x128xf32>
    %cst_61 = arith.constant 1.000000e+00 : f32
    %379 = vector.broadcast %cst_61 : f32 to vector<2x128xf32>
    %380 = arith.addf %379, %378 : vector<2x128xf32>
    %381 = arith.divf %379, %380 : vector<2x128xf32>
    %382 = vector.extract_strided_slice %381 {offsets = [0, 0], sizes = [2, 64], strides = [1, 1]} : vector<2x128xf32> to vector<2x64xf32>
    %383 = vector.extract_strided_slice %381 {offsets = [0, 64], sizes = [2, 64], strides = [1, 1]} : vector<2x128xf32> to vector<2x64xf32>
    %384 = vector.extract_strided_slice %371 {offsets = [0, 128], sizes = [2, 64], strides = [1, 1]} : vector<2x192xf32> to vector<2x64xf32>
    %385 = vector.extract_strided_slice %373 {offsets = [0, 128], sizes = [2, 64], strides = [1, 1]} : vector<2x192xf32> to vector<2x64xf32>
    %386 = vector.broadcast %285 : vector<1x64xf32> to vector<2x64xf32>
    %387 = arith.addf %385, %386 : vector<2x64xf32>
    %388 = arith.mulf %382, %387 : vector<2x64xf32>
    %389 = arith.addf %384, %388 : vector<2x64xf32>
    %390 = math.tanh %389 : vector<2x64xf32>
    %cst_62 = arith.constant 1.000000e+00 : f32
    %391 = vector.broadcast %cst_62 : f32 to vector<2x64xf32>
    %392 = arith.subf %391, %383 : vector<2x64xf32>
    %393 = arith.mulf %392, %390 : vector<2x64xf32>
    %394 = arith.mulf %383, %366 : vector<2x64xf32>
    %395 = arith.addf %393, %394 : vector<2x64xf32>
    %396 = vector.extract_strided_slice %288 {offsets = [6, 0], sizes = [2, 192], strides = [1, 1]} : vector<16x192xf32> to vector<2x192xf32>
    %397 = vector.extract_strided_slice %288 {offsets = [8, 0], sizes = [2, 192], strides = [1, 1]} : vector<16x192xf32> to vector<2x192xf32>
    %398 = vector.shape_cast %307 : vector<1x192xi1> to vector<1x192xi1>
    %399 = vector.broadcast %398 : vector<1x192xi1> to vector<2x192xi1>
    %400 = arith.select %399, %396, %397 : vector<2x192xi1>, vector<2x192xf32>
    %401 = arith.truncf %395 : vector<2x64xf32> to vector<2x64xbf16>
    %cst_63 = arith.constant dense<0.000000e+00> : vector<2x192xf32>
    %402 = tpu.matmul %401, %284, %cst_63 {dimension_numbers = #tpu.dot_dimension_numbers<[1], [0], [0], [1], [0, 0, 1, 1], [], []>} : vector<2x64xbf16>, vector<64x192xbf16>, vector<2x192xf32> -> vector<2x192xf32>
    %403 = vector.extract_strided_slice %400 {offsets = [0, 0], sizes = [2, 128], strides = [1, 1]} : vector<2x192xf32> to vector<2x128xf32>
    %404 = vector.extract_strided_slice %402 {offsets = [0, 0], sizes = [2, 128], strides = [1, 1]} : vector<2x192xf32> to vector<2x128xf32>
    %405 = arith.addf %403, %404 : vector<2x128xf32>
    %406 = arith.negf %405 : vector<2x128xf32>
    %407 = math.exp %406 : vector<2x128xf32>
    %cst_64 = arith.constant 1.000000e+00 : f32
    %408 = vector.broadcast %cst_64 : f32 to vector<2x128xf32>
    %409 = arith.addf %408, %407 : vector<2x128xf32>
    %410 = arith.divf %408, %409 : vector<2x128xf32>
    %411 = vector.extract_strided_slice %410 {offsets = [0, 0], sizes = [2, 64], strides = [1, 1]} : vector<2x128xf32> to vector<2x64xf32>
    %412 = vector.extract_strided_slice %410 {offsets = [0, 64], sizes = [2, 64], strides = [1, 1]} : vector<2x128xf32> to vector<2x64xf32>
    %413 = vector.extract_strided_slice %400 {offsets = [0, 128], sizes = [2, 64], strides = [1, 1]} : vector<2x192xf32> to vector<2x64xf32>
    %414 = vector.extract_strided_slice %402 {offsets = [0, 128], sizes = [2, 64], strides = [1, 1]} : vector<2x192xf32> to vector<2x64xf32>
    %415 = vector.broadcast %285 : vector<1x64xf32> to vector<2x64xf32>
    %416 = arith.addf %414, %415 : vector<2x64xf32>
    %417 = arith.mulf %411, %416 : vector<2x64xf32>
    %418 = arith.addf %413, %417 : vector<2x64xf32>
    %419 = math.tanh %418 : vector<2x64xf32>
    %cst_65 = arith.constant 1.000000e+00 : f32
    %420 = vector.broadcast %cst_65 : f32 to vector<2x64xf32>
    %421 = arith.subf %420, %412 : vector<2x64xf32>
    %422 = arith.mulf %421, %419 : vector<2x64xf32>
    %423 = arith.mulf %412, %395 : vector<2x64xf32>
    %424 = arith.addf %422, %423 : vector<2x64xf32>
    %425 = vector.extract_strided_slice %288 {offsets = [8, 0], sizes = [2, 192], strides = [1, 1]} : vector<16x192xf32> to vector<2x192xf32>
    %426 = vector.extract_strided_slice %288 {offsets = [6, 0], sizes = [2, 192], strides = [1, 1]} : vector<16x192xf32> to vector<2x192xf32>
    %427 = vector.shape_cast %307 : vector<1x192xi1> to vector<1x192xi1>
    %428 = vector.broadcast %427 : vector<1x192xi1> to vector<2x192xi1>
    %429 = arith.select %428, %425, %426 : vector<2x192xi1>, vector<2x192xf32>
    %430 = arith.truncf %424 : vector<2x64xf32> to vector<2x64xbf16>
    %cst_66 = arith.constant dense<0.000000e+00> : vector<2x192xf32>
    %431 = tpu.matmul %430, %284, %cst_66 {dimension_numbers = #tpu.dot_dimension_numbers<[1], [0], [0], [1], [0, 0, 1, 1], [], []>} : vector<2x64xbf16>, vector<64x192xbf16>, vector<2x192xf32> -> vector<2x192xf32>
    %432 = vector.extract_strided_slice %429 {offsets = [0, 0], sizes = [2, 128], strides = [1, 1]} : vector<2x192xf32> to vector<2x128xf32>
    %433 = vector.extract_strided_slice %431 {offsets = [0, 0], sizes = [2, 128], strides = [1, 1]} : vector<2x192xf32> to vector<2x128xf32>
    %434 = arith.addf %432, %433 : vector<2x128xf32>
    %435 = arith.negf %434 : vector<2x128xf32>
    %436 = math.exp %435 : vector<2x128xf32>
    %cst_67 = arith.constant 1.000000e+00 : f32
    %437 = vector.broadcast %cst_67 : f32 to vector<2x128xf32>
    %438 = arith.addf %437, %436 : vector<2x128xf32>
    %439 = arith.divf %437, %438 : vector<2x128xf32>
    %440 = vector.extract_strided_slice %439 {offsets = [0, 0], sizes = [2, 64], strides = [1, 1]} : vector<2x128xf32> to vector<2x64xf32>
    %441 = vector.extract_strided_slice %439 {offsets = [0, 64], sizes = [2, 64], strides = [1, 1]} : vector<2x128xf32> to vector<2x64xf32>
    %442 = vector.extract_strided_slice %429 {offsets = [0, 128], sizes = [2, 64], strides = [1, 1]} : vector<2x192xf32> to vector<2x64xf32>
    %443 = vector.extract_strided_slice %431 {offsets = [0, 128], sizes = [2, 64], strides = [1, 1]} : vector<2x192xf32> to vector<2x64xf32>
    %444 = vector.broadcast %285 : vector<1x64xf32> to vector<2x64xf32>
    %445 = arith.addf %443, %444 : vector<2x64xf32>
    %446 = arith.mulf %440, %445 : vector<2x64xf32>
    %447 = arith.addf %442, %446 : vector<2x64xf32>
    %448 = math.tanh %447 : vector<2x64xf32>
    %cst_68 = arith.constant 1.000000e+00 : f32
    %449 = vector.broadcast %cst_68 : f32 to vector<2x64xf32>
    %450 = arith.subf %449, %441 : vector<2x64xf32>
    %451 = arith.mulf %450, %448 : vector<2x64xf32>
    %452 = arith.mulf %441, %424 : vector<2x64xf32>
    %453 = arith.addf %451, %452 : vector<2x64xf32>
    %454 = vector.extract_strided_slice %288 {offsets = [10, 0], sizes = [2, 192], strides = [1, 1]} : vector<16x192xf32> to vector<2x192xf32>
    %455 = vector.extract_strided_slice %288 {offsets = [4, 0], sizes = [2, 192], strides = [1, 1]} : vector<16x192xf32> to vector<2x192xf32>
    %456 = vector.shape_cast %307 : vector<1x192xi1> to vector<1x192xi1>
    %457 = vector.broadcast %456 : vector<1x192xi1> to vector<2x192xi1>
    %458 = arith.select %457, %454, %455 : vector<2x192xi1>, vector<2x192xf32>
    %459 = arith.truncf %453 : vector<2x64xf32> to vector<2x64xbf16>
    %cst_69 = arith.constant dense<0.000000e+00> : vector<2x192xf32>
    %460 = tpu.matmul %459, %284, %cst_69 {dimension_numbers = #tpu.dot_dimension_numbers<[1], [0], [0], [1], [0, 0, 1, 1], [], []>} : vector<2x64xbf16>, vector<64x192xbf16>, vector<2x192xf32> -> vector<2x192xf32>
    %461 = vector.extract_strided_slice %458 {offsets = [0, 0], sizes = [2, 128], strides = [1, 1]} : vector<2x192xf32> to vector<2x128xf32>
    %462 = vector.extract_strided_slice %460 {offsets = [0, 0], sizes = [2, 128], strides = [1, 1]} : vector<2x192xf32> to vector<2x128xf32>
    %463 = arith.addf %461, %462 : vector<2x128xf32>
    %464 = arith.negf %463 : vector<2x128xf32>
    %465 = math.exp %464 : vector<2x128xf32>
    %cst_70 = arith.constant 1.000000e+00 : f32
    %466 = vector.broadcast %cst_70 : f32 to vector<2x128xf32>
    %467 = arith.addf %466, %465 : vector<2x128xf32>
    %468 = arith.divf %466, %467 : vector<2x128xf32>
    %469 = vector.extract_strided_slice %468 {offsets = [0, 0], sizes = [2, 64], strides = [1, 1]} : vector<2x128xf32> to vector<2x64xf32>
    %470 = vector.extract_strided_slice %468 {offsets = [0, 64], sizes = [2, 64], strides = [1, 1]} : vector<2x128xf32> to vector<2x64xf32>
    %471 = vector.extract_strided_slice %458 {offsets = [0, 128], sizes = [2, 64], strides = [1, 1]} : vector<2x192xf32> to vector<2x64xf32>
    %472 = vector.extract_strided_slice %460 {offsets = [0, 128], sizes = [2, 64], strides = [1, 1]} : vector<2x192xf32> to vector<2x64xf32>
    %473 = vector.broadcast %285 : vector<1x64xf32> to vector<2x64xf32>
    %474 = arith.addf %472, %473 : vector<2x64xf32>
    %475 = arith.mulf %469, %474 : vector<2x64xf32>
    %476 = arith.addf %471, %475 : vector<2x64xf32>
    %477 = math.tanh %476 : vector<2x64xf32>
    %cst_71 = arith.constant 1.000000e+00 : f32
    %478 = vector.broadcast %cst_71 : f32 to vector<2x64xf32>
    %479 = arith.subf %478, %470 : vector<2x64xf32>
    %480 = arith.mulf %479, %477 : vector<2x64xf32>
    %481 = arith.mulf %470, %453 : vector<2x64xf32>
    %482 = arith.addf %480, %481 : vector<2x64xf32>
    %483 = vector.extract_strided_slice %288 {offsets = [12, 0], sizes = [2, 192], strides = [1, 1]} : vector<16x192xf32> to vector<2x192xf32>
    %484 = vector.extract_strided_slice %288 {offsets = [2, 0], sizes = [2, 192], strides = [1, 1]} : vector<16x192xf32> to vector<2x192xf32>
    %485 = vector.shape_cast %307 : vector<1x192xi1> to vector<1x192xi1>
    %486 = vector.broadcast %485 : vector<1x192xi1> to vector<2x192xi1>
    %487 = arith.select %486, %483, %484 : vector<2x192xi1>, vector<2x192xf32>
    %488 = arith.truncf %482 : vector<2x64xf32> to vector<2x64xbf16>
    %cst_72 = arith.constant dense<0.000000e+00> : vector<2x192xf32>
    %489 = tpu.matmul %488, %284, %cst_72 {dimension_numbers = #tpu.dot_dimension_numbers<[1], [0], [0], [1], [0, 0, 1, 1], [], []>} : vector<2x64xbf16>, vector<64x192xbf16>, vector<2x192xf32> -> vector<2x192xf32>
    %490 = vector.extract_strided_slice %487 {offsets = [0, 0], sizes = [2, 128], strides = [1, 1]} : vector<2x192xf32> to vector<2x128xf32>
    %491 = vector.extract_strided_slice %489 {offsets = [0, 0], sizes = [2, 128], strides = [1, 1]} : vector<2x192xf32> to vector<2x128xf32>
    %492 = arith.addf %490, %491 : vector<2x128xf32>
    %493 = arith.negf %492 : vector<2x128xf32>
    %494 = math.exp %493 : vector<2x128xf32>
    %cst_73 = arith.constant 1.000000e+00 : f32
    %495 = vector.broadcast %cst_73 : f32 to vector<2x128xf32>
    %496 = arith.addf %495, %494 : vector<2x128xf32>
    %497 = arith.divf %495, %496 : vector<2x128xf32>
    %498 = vector.extract_strided_slice %497 {offsets = [0, 0], sizes = [2, 64], strides = [1, 1]} : vector<2x128xf32> to vector<2x64xf32>
    %499 = vector.extract_strided_slice %497 {offsets = [0, 64], sizes = [2, 64], strides = [1, 1]} : vector<2x128xf32> to vector<2x64xf32>
    %500 = vector.extract_strided_slice %487 {offsets = [0, 128], sizes = [2, 64], strides = [1, 1]} : vector<2x192xf32> to vector<2x64xf32>
    %501 = vector.extract_strided_slice %489 {offsets = [0, 128], sizes = [2, 64], strides = [1, 1]} : vector<2x192xf32> to vector<2x64xf32>
    %502 = vector.broadcast %285 : vector<1x64xf32> to vector<2x64xf32>
    %503 = arith.addf %501, %502 : vector<2x64xf32>
    %504 = arith.mulf %498, %503 : vector<2x64xf32>
    %505 = arith.addf %500, %504 : vector<2x64xf32>
    %506 = math.tanh %505 : vector<2x64xf32>
    %cst_74 = arith.constant 1.000000e+00 : f32
    %507 = vector.broadcast %cst_74 : f32 to vector<2x64xf32>
    %508 = arith.subf %507, %499 : vector<2x64xf32>
    %509 = arith.mulf %508, %506 : vector<2x64xf32>
    %510 = arith.mulf %499, %482 : vector<2x64xf32>
    %511 = arith.addf %509, %510 : vector<2x64xf32>
    %512 = vector.extract_strided_slice %288 {offsets = [14, 0], sizes = [2, 192], strides = [1, 1]} : vector<16x192xf32> to vector<2x192xf32>
    %513 = vector.extract_strided_slice %288 {offsets = [0, 0], sizes = [2, 192], strides = [1, 1]} : vector<16x192xf32> to vector<2x192xf32>
    %514 = vector.shape_cast %307 : vector<1x192xi1> to vector<1x192xi1>
    %515 = vector.broadcast %514 : vector<1x192xi1> to vector<2x192xi1>
    %516 = arith.select %515, %512, %513 : vector<2x192xi1>, vector<2x192xf32>
    %517 = arith.truncf %511 : vector<2x64xf32> to vector<2x64xbf16>
    %cst_75 = arith.constant dense<0.000000e+00> : vector<2x192xf32>
    %518 = tpu.matmul %517, %284, %cst_75 {dimension_numbers = #tpu.dot_dimension_numbers<[1], [0], [0], [1], [0, 0, 1, 1], [], []>} : vector<2x64xbf16>, vector<64x192xbf16>, vector<2x192xf32> -> vector<2x192xf32>
    %519 = vector.extract_strided_slice %516 {offsets = [0, 0], sizes = [2, 128], strides = [1, 1]} : vector<2x192xf32> to vector<2x128xf32>
    %520 = vector.extract_strided_slice %518 {offsets = [0, 0], sizes = [2, 128], strides = [1, 1]} : vector<2x192xf32> to vector<2x128xf32>
    %521 = arith.addf %519, %520 : vector<2x128xf32>
    %522 = arith.negf %521 : vector<2x128xf32>
    %523 = math.exp %522 : vector<2x128xf32>
    %cst_76 = arith.constant 1.000000e+00 : f32
    %524 = vector.broadcast %cst_76 : f32 to vector<2x128xf32>
    %525 = arith.addf %524, %523 : vector<2x128xf32>
    %526 = arith.divf %524, %525 : vector<2x128xf32>
    %527 = vector.extract_strided_slice %526 {offsets = [0, 0], sizes = [2, 64], strides = [1, 1]} : vector<2x128xf32> to vector<2x64xf32>
    %528 = vector.extract_strided_slice %526 {offsets = [0, 64], sizes = [2, 64], strides = [1, 1]} : vector<2x128xf32> to vector<2x64xf32>
    %529 = vector.extract_strided_slice %516 {offsets = [0, 128], sizes = [2, 64], strides = [1, 1]} : vector<2x192xf32> to vector<2x64xf32>
    %530 = vector.extract_strided_slice %518 {offsets = [0, 128], sizes = [2, 64], strides = [1, 1]} : vector<2x192xf32> to vector<2x64xf32>
    %531 = vector.broadcast %285 : vector<1x64xf32> to vector<2x64xf32>
    %532 = arith.addf %530, %531 : vector<2x64xf32>
    %533 = arith.mulf %527, %532 : vector<2x64xf32>
    %534 = arith.addf %529, %533 : vector<2x64xf32>
    %535 = math.tanh %534 : vector<2x64xf32>
    %cst_77 = arith.constant 1.000000e+00 : f32
    %536 = vector.broadcast %cst_77 : f32 to vector<2x64xf32>
    %537 = arith.subf %536, %528 : vector<2x64xf32>
    %538 = arith.mulf %537, %535 : vector<2x64xf32>
    %539 = arith.mulf %528, %511 : vector<2x64xf32>
    %540 = arith.addf %538, %539 : vector<2x64xf32>
    %541 = vector.extract_strided_slice %337 {offsets = [0, 0], sizes = [2, 32], strides = [1, 1]} : vector<2x64xf32> to vector<2x32xf32>
    %542 = vector.extract_strided_slice %366 {offsets = [0, 0], sizes = [2, 32], strides = [1, 1]} : vector<2x64xf32> to vector<2x32xf32>
    %543 = vector.extract_strided_slice %395 {offsets = [0, 0], sizes = [2, 32], strides = [1, 1]} : vector<2x64xf32> to vector<2x32xf32>
    %544 = vector.extract_strided_slice %424 {offsets = [0, 0], sizes = [2, 32], strides = [1, 1]} : vector<2x64xf32> to vector<2x32xf32>
    %545 = vector.extract_strided_slice %453 {offsets = [0, 0], sizes = [2, 32], strides = [1, 1]} : vector<2x64xf32> to vector<2x32xf32>
    %546 = vector.extract_strided_slice %482 {offsets = [0, 0], sizes = [2, 32], strides = [1, 1]} : vector<2x64xf32> to vector<2x32xf32>
    %547 = vector.extract_strided_slice %511 {offsets = [0, 0], sizes = [2, 32], strides = [1, 1]} : vector<2x64xf32> to vector<2x32xf32>
    %548 = vector.extract_strided_slice %540 {offsets = [0, 0], sizes = [2, 32], strides = [1, 1]} : vector<2x64xf32> to vector<2x32xf32>
    %549 = tpu.concatenate %541, %542, %543, %544, %545, %546, %547, %548 in 0 : vector<2x32xf32>, vector<2x32xf32>, vector<2x32xf32>, vector<2x32xf32>, vector<2x32xf32>, vector<2x32xf32>, vector<2x32xf32>, vector<2x32xf32> -> vector<16x32xf32>
    %550 = vector.extract_strided_slice %540 {offsets = [0, 32], sizes = [2, 32], strides = [1, 1]} : vector<2x64xf32> to vector<2x32xf32>
    %551 = vector.extract_strided_slice %511 {offsets = [0, 32], sizes = [2, 32], strides = [1, 1]} : vector<2x64xf32> to vector<2x32xf32>
    %552 = vector.extract_strided_slice %482 {offsets = [0, 32], sizes = [2, 32], strides = [1, 1]} : vector<2x64xf32> to vector<2x32xf32>
    %553 = vector.extract_strided_slice %453 {offsets = [0, 32], sizes = [2, 32], strides = [1, 1]} : vector<2x64xf32> to vector<2x32xf32>
    %554 = vector.extract_strided_slice %424 {offsets = [0, 32], sizes = [2, 32], strides = [1, 1]} : vector<2x64xf32> to vector<2x32xf32>
    %555 = vector.extract_strided_slice %395 {offsets = [0, 32], sizes = [2, 32], strides = [1, 1]} : vector<2x64xf32> to vector<2x32xf32>
    %556 = vector.extract_strided_slice %366 {offsets = [0, 32], sizes = [2, 32], strides = [1, 1]} : vector<2x64xf32> to vector<2x32xf32>
    %557 = vector.extract_strided_slice %337 {offsets = [0, 32], sizes = [2, 32], strides = [1, 1]} : vector<2x64xf32> to vector<2x32xf32>
    %558 = tpu.concatenate %550, %551, %552, %553, %554, %555, %556, %557 in 0 : vector<2x32xf32>, vector<2x32xf32>, vector<2x32xf32>, vector<2x32xf32>, vector<2x32xf32>, vector<2x32xf32>, vector<2x32xf32>, vector<2x32xf32> -> vector<16x32xf32>
    %559 = tpu.concatenate %549, %558 in 1 : vector<16x32xf32>, vector<16x32xf32> -> vector<16x64xf32>
    %560 = vector.extract_strided_slice %540 {offsets = [0, 0], sizes = [2, 32], strides = [1, 1]} : vector<2x64xf32> to vector<2x32xf32>
    %561 = vector.extract_strided_slice %540 {offsets = [0, 32], sizes = [2, 32], strides = [1, 1]} : vector<2x64xf32> to vector<2x32xf32>
    %562 = arith.truncf %559 : vector<16x64xf32> to vector<16x64xbf16>
    %c0_78 = arith.constant 0 : index
    %c0_79 = arith.constant 0 : index
    %563 = vector.load %arg10[%c0_78, %c0_79] : memref<64x16xbf16, #tpu.memory_space<vmem>>, vector<64x16xbf16>
    %cst_80 = arith.constant dense<0.000000e+00> : vector<16x16xf32>
    %564 = tpu.matmul %562, %563, %cst_80 {dimension_numbers = #tpu.dot_dimension_numbers<[1], [0], [0], [1], [0, 0, 1, 1], [], []>} : vector<16x64xbf16>, vector<64x16xbf16>, vector<16x16xf32> -> vector<16x16xf32>
    %c0_81 = arith.constant 0 : index
    %c0_82 = arith.constant 0 : index
    %565 = vector.load %arg11[%c0_81, %c0_82] : memref<1x16xf32, #tpu.memory_space<vmem>>, vector<1x16xf32>
    %566 = vector.broadcast %565 : vector<1x16xf32> to vector<16x16xf32>
    %567 = arith.addf %564, %566 : vector<16x16xf32>
    %cst_83 = arith.constant 0.000000e+00 : f32
    %568 = vector.broadcast %cst_83 : f32 to vector<16x16xf32>
    %569 = arith.maximumf %567, %568 : vector<16x16xf32>
    %570 = arith.truncf %569 : vector<16x16xf32> to vector<16x16xbf16>
    %c0_84 = arith.constant 0 : index
    %c0_85 = arith.constant 0 : index
    %571 = vector.load %arg12[%c0_84, %c0_85] : memref<16x1xbf16, #tpu.memory_space<vmem>>, vector<16x1xbf16>
    %cst_86 = arith.constant dense<0.000000e+00> : vector<16x1xf32>
    %572 = tpu.matmul %570, %571, %cst_86 {dimension_numbers = #tpu.dot_dimension_numbers<[1], [0], [0], [1], [0, 0, 1, 1], [], []>} : vector<16x16xbf16>, vector<16x1xbf16>, vector<16x1xf32> -> vector<16x1xf32>
    %c0_87 = arith.constant 0 : index
    %c0_88 = arith.constant 0 : index
    %573 = vector.load %arg13[%c0_87, %c0_88] : memref<1x1xf32, #tpu.memory_space<vmem>>, vector<1x1xf32>
    %574 = vector.broadcast %573 : vector<1x1xf32> to vector<16x1xf32>
    %575 = arith.addf %572, %574 : vector<16x1xf32>
    %576 = arith.negf %575 : vector<16x1xf32>
    %577 = math.exp %576 : vector<16x1xf32>
    %cst_89 = arith.constant 1.000000e+00 : f32
    %578 = vector.broadcast %cst_89 : f32 to vector<16x1xf32>
    %579 = arith.addf %578, %577 : vector<16x1xf32>
    %580 = arith.divf %578, %579 : vector<16x1xf32>
    %c0_90 = arith.constant 0 : index
    %c0_91 = arith.constant 0 : index
    %581 = vector.load %arg14[%c0_90, %c0_91] : memref<16x1xf32, #tpu.memory_space<vmem>>, vector<16x1xf32>
    tpu.vector_store %arg14[%c0_90, %c0_91], %580 {strides = array<i32>} : memref<16x1xf32, #tpu.memory_space<vmem>>, vector<16x1xf32>,
    %582 = tpu.concatenate %279, %280, %560, %561 in 0 : vector<2x32xf32>, vector<2x32xf32>, vector<2x32xf32>, vector<2x32xf32> -> vector<8x32xf32>
    %c0_92 = arith.constant 0 : index
    %c0_93 = arith.constant 0 : index
    %583 = vector.load %arg15[%c0_92, %c0_93] : memref<8x32xf32, #tpu.memory_space<vmem>>, vector<8x32xf32>
    tpu.vector_store %arg15[%c0_92, %c0_93], %582 {strides = array<i32>} : memref<8x32xf32, #tpu.memory_space<vmem>>, vector<8x32xf32>,
    return
  }
  func.func @transform_0(%arg0: i32) -> (i32, i32) {
    %c0_i32 = arith.constant 0 : i32
    %c0_i32_0 = arith.constant 0 : i32
    %c0_i32_1 = arith.constant 0 : i32
    return %c0_i32, %c0_i32_0 : i32, i32
  }
  func.func @transform_1(%arg0: i32) -> (i32, i32) {
    %c0_i32 = arith.constant 0 : i32
    %c0_i32_0 = arith.constant 0 : i32
    %c0_i32_1 = arith.constant 0 : i32
    return %c0_i32, %c0_i32_0 : i32, i32
  }
  func.func @transform_2(%arg0: i32) -> (i32, i32) {
    %c0_i32 = arith.constant 0 : i32
    %c0_i32_0 = arith.constant 0 : i32
    %c0_i32_1 = arith.constant 0 : i32
    return %c0_i32, %c0_i32_0 : i32, i32
  }
  func.func @transform_3(%arg0: i32) -> (i32, i32) {
    %c0_i32 = arith.constant 0 : i32
    %c0_i32_0 = arith.constant 0 : i32
    %c0_i32_1 = arith.constant 0 : i32
    return %c0_i32, %c0_i32_0 : i32, i32
  }
  func.func @transform_4(%arg0: i32) -> (i32, i32) {
    %c0_i32 = arith.constant 0 : i32
    %c0_i32_0 = arith.constant 0 : i32
    %c0_i32_1 = arith.constant 0 : i32
    return %c0_i32, %c0_i32_0 : i32, i32
  }
  func.func @transform_5(%arg0: i32) -> (i32, i32) {
    %c0_i32 = arith.constant 0 : i32
    %c0_i32_0 = arith.constant 0 : i32
    %c0_i32_1 = arith.constant 0 : i32
    return %c0_i32, %c0_i32_0 : i32, i32
  }
  func.func @transform_6(%arg0: i32) -> (i32, i32) {
    %c0_i32 = arith.constant 0 : i32
    %c0_i32_0 = arith.constant 0 : i32
    %c0_i32_1 = arith.constant 0 : i32
    return %c0_i32, %c0_i32_0 : i32, i32
  }
  func.func @transform_7(%arg0: i32) -> (i32, i32) {
    %c0_i32 = arith.constant 0 : i32
    %c0_i32_0 = arith.constant 0 : i32
    %c0_i32_1 = arith.constant 0 : i32
    return %c0_i32, %c0_i32_0 : i32, i32
  }
  func.func @transform_8(%arg0: i32) -> (i32, i32) {
    %c0_i32 = arith.constant 0 : i32
    %c0_i32_0 = arith.constant 0 : i32
    %c0_i32_1 = arith.constant 0 : i32
    return %c0_i32, %c0_i32_0 : i32, i32
  }
  func.func @transform_9(%arg0: i32) -> (i32, i32) {
    %c0_i32 = arith.constant 0 : i32
    %c0_i32_0 = arith.constant 0 : i32
    %c0_i32_1 = arith.constant 0 : i32
    return %c0_i32, %c0_i32_0 : i32, i32
  }
  func.func @transform_10(%arg0: i32) -> (i32, i32) {
    %c0_i32 = arith.constant 0 : i32
    %c0_i32_0 = arith.constant 0 : i32
    %c0_i32_1 = arith.constant 0 : i32
    return %c0_i32, %c0_i32_0 : i32, i32
  }
  func.func @transform_11(%arg0: i32) -> (i32, i32) {
    %c0_i32 = arith.constant 0 : i32
    %c0_i32_0 = arith.constant 0 : i32
    %c0_i32_1 = arith.constant 0 : i32
    return %c0_i32, %c0_i32_0 : i32, i32
  }
  func.func @transform_12(%arg0: i32) -> (i32, i32) {
    %c0_i32 = arith.constant 0 : i32
    %c0_i32_0 = arith.constant 0 : i32
    %c0_i32_1 = arith.constant 0 : i32
    return %c0_i32, %c0_i32_0 : i32, i32
  }
  func.func @transform_13(%arg0: i32) -> (i32, i32) {
    %c0_i32 = arith.constant 0 : i32
    %c0_i32_0 = arith.constant 0 : i32
    %c0_i32_1 = arith.constant 0 : i32
    return %c0_i32, %c0_i32_0 : i32, i32
  }
  func.func @transform_14(%arg0: i32) -> (i32, i32) {
    %c0_i32 = arith.constant 0 : i32
    %c0_i32_0 = arith.constant 0 : i32
    %c0_i32_1 = arith.constant 0 : i32
    return %c0_i32, %c0_i32_0 : i32, i32
  }
}

</mosaic_0001>

<llo_original>
// kernel: gru_sex_net_forward.1
$region0: #{gru_sex_net_forward.1}
  #allocation0 [shape = 'u32[]', space=smem, size = 0x4, offset = 0x4, fixed_abs, tag = 'smem constant byte address 0x4 - core index']
  #allocation1 [shape = 'u32[144,128]{1,0:T(1,128)}', space=vmem, size = 0x12000, scoped, tag = 'internal scratch']
  #allocation2 [shape = 'f32[1,1]{1,0:T(1,128)S(1)}', space=vmem, size = 0x200, scoped, tag = 'scoped memory for gru_sex_net_forward.1']
  %s0 = inlined_call_operand.vmem [shape: bf16[16,16], index: 0, kind: input, shape index: {}]
  %s1 = inlined_call_operand.vmem [shape: bf16[16,192], index: 1, kind: input, shape index: {}]
  %s2 = inlined_call_operand.vmem [shape: f32[1,192], index: 2, kind: input, shape index: {}]
  %s3 = inlined_call_operand.vmem [shape: bf16[64,192], index: 3, kind: input, shape index: {}]
  %s4 = inlined_call_operand.vmem [shape: f32[1,64], index: 4, kind: input, shape index: {}]
  %s5 = inlined_call_operand.hbm [shape: bf16[64,192], index: 5, kind: input, shape index: {}]
  %s6 = inlined_call_operand.vmem [shape: f32[1,192], index: 6, kind: input, shape index: {}]
  %s7 = inlined_call_operand.hbm [shape: bf16[64,192], index: 7, kind: input, shape index: {}]
  %s8 = inlined_call_operand.vmem [shape: f32[1,64], index: 8, kind: input, shape index: {}]
  %s9 = inlined_call_operand.vmem [shape: bf16[64,16], index: 9, kind: input, shape index: {}]
  %s10 = inlined_call_operand.vmem [shape: f32[1,16], index: 10, kind: input, shape index: {}]
  %s11 = inlined_call_operand.vmem [shape: bf16[16,1], index: 11, kind: input, shape index: {}]
  %s12 = inlined_call_operand.<no memory space> [shape: f32[1,1], index: 12, kind: input, shape index: {}]
  %s13 = inlined_call_operand.vmem [shape: f32[16,1], index: 13, kind: output, shape index: {0}]
  %s14 = inlined_call_operand.hbm [shape: f32[8,32], index: 14, kind: output, shape index: {1}]
  %15 = xla_tuple %s13, %s14
  %s16 = sld [smem:[#allocation0]]
  $region78: #{gru_sex_net_forward.1} parent=0
    _
  %s18 = ssub.s32 1, %s16
  %s19 = scalar_select 0, %s18, %s16
  %v20 = vstv %s12
  %21 = vst [vmem:[#allocation2] sm:$0x1] %v20
  $region1: #{gru_sex_net_forward.1} parent=0
    #allocation3 [shape = 'u8[32768]{0}', space=vmem, size = 0x8000, scoped, tag = 'input window, operand 5, single buffered']
    #allocation4 [shape = 's32[1]{0}', space=sflag, size = 0x4, scoped, tag = 'scoped memory for gru_sex_net_forward.1']
    #allocation5 [shape = 's32[1]{0}', space=sflag, size = 0x4, scoped, tag = 'scoped memory for gru_sex_net_forward.1']
    #allocation6 [shape = 'u8[32768]{0}', space=vmem, size = 0x8000, scoped, tag = 'input window, operand 7, single buffered']
    #allocation7 [shape = 's32[1]{0}', space=sflag, size = 0x4, scoped, tag = 'scoped memory for gru_sex_net_forward.1']
    #allocation8 [shape = 'u8[4096]{0}', space=vmem, size = 0x1000, scoped, tag = 'output window, operand 1, single buffered']
    %22 = vsyncpa [#allocation4], 0
    %23 = vsyncpa [#allocation7], 0
    %24 = vsyncpa [#allocation5], 0
    // Predicated region
    $region2: #{gru_sex_net_forward.1} parent=1 // pred_check
      _
    $region3: #{gru_sex_net_forward.1} parent=1 // pred_check_branch
      %26 = sbr.rel (0) target = $region5
    $region4: #{gru_sex_net_forward.1} parent=1 // pred_region
      _
    $region5: #{gru_sex_net_forward.1} parent=1 // pred_fallthru
      _
    // Predicated region
    $region6: #{gru_sex_net_forward.1} parent=1 // pred_check
      _
    $region7: #{gru_sex_net_forward.1} parent=1 // pred_check_branch
      %28 = sbr.rel (0) target = $region9
    $region8: #{gru_sex_net_forward.1} parent=1 // pred_region
      _
    $region9: #{gru_sex_net_forward.1} parent=1 // pred_fallthru
      _
    // Predicated region
    $region10: #{gru_sex_net_forward.1} parent=1 // pred_check
      _
    $region11: #{gru_sex_net_forward.1} parent=1 // pred_check_branch
      %30 = sbr.rel (0) target = $region13
    $region12: #{gru_sex_net_forward.1} parent=1 // pred_region
      _
    $region13: #{gru_sex_net_forward.1} parent=1 // pred_fallthru
      _
    // Predicated region
    $region14: #{gru_sex_net_forward.1} parent=1 // pred_check
      _
    $region15: #{gru_sex_net_forward.1} parent=1 // pred_check_branch
      %32 = sbr.rel (0) target = $region17
    $region16: #{gru_sex_net_forward.1} parent=1 // pred_region
      _
    $region17: #{gru_sex_net_forward.1} parent=1 // pred_fallthru
      _
    // Predicated region
    $region18: #{gru_sex_net_forward.1} parent=1 // pred_check
      _
    $region19: #{gru_sex_net_forward.1} parent=1 // pred_check_branch
      %34 = sbr.rel (0) target = $region21
    $region20: #{gru_sex_net_forward.1} parent=1 // pred_region
      _
    $region21: #{gru_sex_net_forward.1} parent=1 // pred_fallthru
      _
    // Predicated region
    $region22: #{gru_sex_net_forward.1} parent=1 // pred_check
      _
    $region23: #{gru_sex_net_forward.1} parent=1 // pred_check_branch
      %36 = sbr.rel (0) target = $region25
    $region24: #{gru_sex_net_forward.1} parent=1 // pred_region
      %s38 = ssub.s32 1024, 1024
      %39 = vsyncadd [#allocation4], %s38
      %s40 = sshll.u32 [#allocation3], 4
      %s41 = int_to_ptr.vmem [resolvable:$true] %s40
      %46 = dma.hbm_to_vmem [thread:$0]  %s5, 1024, %s41, [#allocation4], 128, 128, 8
    $region25: #{gru_sex_net_forward.1} parent=1 // pred_fallthru
      _
    // Predicated region
    $region26: #{gru_sex_net_forward.1} parent=1 // pred_check
      _
    $region27: #{gru_sex_net_forward.1} parent=1 // pred_check_branch
      %48 = sbr.rel (0) target = $region29
    $region28: #{gru_sex_net_forward.1} parent=1 // pred_region
      _
    $region29: #{gru_sex_net_forward.1} parent=1 // pred_fallthru
      _
    // Predicated region
    $region30: #{gru_sex_net_forward.1} parent=1 // pred_check
      _
    $region31: #{gru_sex_net_forward.1} parent=1 // pred_check_branch
      %50 = sbr.rel (0) target = $region33
    $region32: #{gru_sex_net_forward.1} parent=1 // pred_region
      %s52 = ssub.s32 1024, 1024
      %53 = vsyncadd [#allocation7], %s52
      %s54 = sshll.u32 [#allocation6], 4
      %s55 = int_to_ptr.vmem [resolvable:$true] %s54
      %60 = dma.hbm_to_vmem [thread:$0]  %s7, 1024, %s55, [#allocation7], 128, 128, 8
    $region33: #{gru_sex_net_forward.1} parent=1 // pred_fallthru
      _
    // Predicated region
    $region34: #{gru_sex_net_forward.1} parent=1 // pred_check
      _
    $region35: #{gru_sex_net_forward.1} parent=1 // pred_check_branch
      %62 = sbr.rel (0) target = $region37
    $region36: #{gru_sex_net_forward.1} parent=1 // pred_region
      _
    $region37: #{gru_sex_net_forward.1} parent=1 // pred_fallthru
      _
    // Predicated region
    $region38: #{gru_sex_net_forward.1} parent=1 // pred_check
      _
    $region39: #{gru_sex_net_forward.1} parent=1 // pred_check_branch
      %64 = sbr.rel (0) target = $region41
    $region40: #{gru_sex_net_forward.1} parent=1 // pred_region
      _
    $region41: #{gru_sex_net_forward.1} parent=1 // pred_fallthru
      _
    // Predicated region
    $region42: #{gru_sex_net_forward.1} parent=1 // pred_check
      _
    $region43: #{gru_sex_net_forward.1} parent=1 // pred_check_branch
      %66 = sbr.rel (0) target = $region45
    $region44: #{gru_sex_net_forward.1} parent=1 // pred_region
      _
    $region45: #{gru_sex_net_forward.1} parent=1 // pred_fallthru
      _
    // Predicated region
    $region46: #{gru_sex_net_forward.1} parent=1 // pred_check
      _
    $region47: #{gru_sex_net_forward.1} parent=1 // pred_check_branch
      %68 = sbr.rel (0) target = $region49
    $region48: #{gru_sex_net_forward.1} parent=1 // pred_region
      _
    $region49: #{gru_sex_net_forward.1} parent=1 // pred_fallthru
      _
    // Predicated region
    $region50: #{gru_sex_net_forward.1} parent=1 // pred_check
      _
    $region51: #{gru_sex_net_forward.1} parent=1 // pred_check_branch
      %70 = sbr.rel (0) target = $region53
    $region52: #{gru_sex_net_forward.1} parent=1 // pred_region
      _
    $region53: #{gru_sex_net_forward.1} parent=1 // pred_fallthru
      _
    // Predicated region
    $region54: #{gru_sex_net_forward.1} parent=1 // pred_check
      _
    $region55: #{gru_sex_net_forward.1} parent=1 // pred_check_branch
      %72 = sbr.rel (0) target = $region57
    $region56: #{gru_sex_net_forward.1} parent=1 // pred_region
      %73 = dma.done [#allocation4], 1024
    $region57: #{gru_sex_net_forward.1} parent=1 // pred_fallthru
      _
    // Predicated region
    $region58: #{gru_sex_net_forward.1} parent=1 // pred_check
      _
    $region59: #{gru_sex_net_forward.1} parent=1 // pred_check_branch
      %75 = sbr.rel (0) target = $region61
    $region60: #{gru_sex_net_forward.1} parent=1 // pred_region
      %76 = dma.done [#allocation7], 1024
    $region61: #{gru_sex_net_forward.1} parent=1 // pred_fallthru
      _
    %v78 = vld [vmem:[%s0] sm:$0xf]
    %v79 = vld [vmem:[%s0 + $0x4] sm:$0xf]
    %v80 = vld [vmem:[%s1] sm:$0xff]
    %v81 = vld [vmem:[%s1 + $0x8] sm:$0xff]
    %v82 = vld [vmem:[%s2] sm:$0x3]
    %v83 = vld [vmem:[%s3] sm:$0xff]
    %v84 = vld [vmem:[%s3 + $0x8] sm:$0xff]
    %v85 = vld [vmem:[%s3 + $0x10] sm:$0xff]
    %v86 = vld [vmem:[%s3 + $0x18] sm:$0xff]
    %v87 = vld [vmem:[%s3 + $0x20] sm:$0xff]
    %v88 = vld [vmem:[%s3 + $0x28] sm:$0xff]
    %v89 = vld [vmem:[%s3 + $0x30] sm:$0xff]
    %v90 = vld [vmem:[%s3 + $0x38] sm:$0xff]
    %v91 = vld [vmem:[%s4] sm:$0x1]
    %v93 = vlaneseq
    %v94 = vshrl.u32 %v93, 7
    %v95 = vsub.s32 0, %v94
    %v96 = vrot.slane %v82, %v95
    %v97 = vlaneseq
    %v98 = vshrl.u32 %v97, 7
    %v99 = vsub.s32 1, %v98
    %v100 = vrot.slane %v82, %v99
    %v105 = vunpack.c.l.b16 %v78
    %v106 = vunpack.c.l.b16 %v79
    %v107 = vpack.c.b16 %v106, %v105
    %v110 = vunpack.c.l.b16 %v80
    %v111 = vunpack.c.h.b16 %v80
    %v112 = vunpack.c.l.b16 %v81
    %v113 = vunpack.c.h.b16 %v81
    %v114 = vpack.c.b16 %v112, %v110
    %v115 = vpack.c.b16 %v113, %v111
    %vm118 = vcmask 130048
    %v120 = vsel %vm118, %v107, 0
    %122 = vmatprep.subr.bf16.mxu0 0
    %123 = vmatpush1.bf16.msra.mxu0 0
    %124 = vmatprep.subr.bf16.mxu0 0
    %125 = vmatpush1.bf16.msra.mxu0 0
    %126 = vmatprep.subr.bf16.mxu0 0
    %127 = vmatpush1.bf16.msra.mxu0 0
    %128 = vmatprep.subr.bf16.mxu0 0
    %129 = vmatpush1.bf16.msra.mxu0 0
    %130 = vmatprep.subr.bf16.mxu0 0
    %131 = vmatpush1.bf16.msra.mxu0 0
    %132 = vmatprep.subr.bf16.mxu0 0
    %133 = vmatpush1.bf16.msra.mxu0 0
    %134 = vmatprep.subr.bf16.mxu0 0
    %135 = vmatpush1.bf16.msra.mxu0 0
    %136 = vmatprep.subr.bf16.mxu0 %v115
    %137 = vmatpush1.bf16.msra.mxu0 %v114
    %138 = vmatprep.subr.bf16.mxu0 0
    %139 = vmatpush2.bf16.msra.mxu0 0
    %140 = vmatprep.subr.bf16.mxu0 0
    %141 = vmatpush2.bf16.msra.mxu0 0
    %142 = vmatprep.subr.bf16.mxu0 0
    %143 = vmatpush2.bf16.msra.mxu0 0
    %144 = vmatprep.subr.bf16.mxu0 0
    %145 = vmatpush2.bf16.msra.mxu0 0
    %146 = vmatprep.subr.bf16.mxu0 0
    %147 = vmatpush2.bf16.msra.mxu0 0
    %148 = vmatprep.subr.bf16.mxu0 0
    %149 = vmatpush2.bf16.msra.mxu0 0
    %150 = vmatprep.subr.bf16.mxu0 0
    %151 = vmatpush2.bf16.msra.mxu0 0
    %152 = vmatprep.subr.bf16.mxu0 0
    %153 = vmatpush2.bf16.msra.mxu0 0
    %154 = vmatprep.mubr.bf16.mxu0 0
    %155 = vmatmul.mubr.bf16.gmra.mxu0 %v120
    %v156 = vpop.f32.mrf.mxu0
    %v157 = vadd.f32 %v96, %v156
    %v158 = vpop.f32.mrf.mxu0
    %v159 = vadd.f32 %v100, %v158
    %v160 = vpop.f32.mrf.mxu0
    %v161 = vadd.f32 %v96, %v160
    %v162 = vpop.f32.mrf.mxu0
    %v163 = vadd.f32 %v100, %v162
    %164 = vdwg.mxu0
    %v165 = vlaneseq
    %v166 = vand.u32 %v165, 127
    %v167 = vadd.s32 %v166, 128
    %vm168 = vcmp.lt.s32.totalorder %v166, 0
    %v169 = vsub.s32 0, %v166
    %v170 = vsel %vm168, %v169, %v166
    %v171 = vshrl.u32 %v170, 6
    %v172 = vand.u32 %v170, 63
    %v173 = vsub.s32 0, %v172
    %v174 = vsel %vm168, %v173, %v172
    %vm175 = vcmp.lt.s32.totalorder %v167, 0
    %v176 = vsub.s32 0, %v167
    %v177 = vsel %vm175, %v176, %v167
    %v178 = vshrl.u32 %v177, 6
    %v179 = vand.u32 %v177, 63
    %v180 = vsub.s32 0, %v179
    %v181 = vsel %vm175, %v180, %v179
    %vm182 = vcmp.ne.s32.totalorder %v174, 0
    %vm183 = vcmp.ne.s32.totalorder %v181, 0
    %vm184 = vcmp.lt.s32.totalorder %v174, 0
    %vm185 = vcmp.lt.s32.totalorder %v181, 0
    %vm186 = vmand %vm184, %vm182
    %vm187 = vmand %vm185, %vm183
    %v188 = vadd.s32 %v174, 64
    %v189 = vadd.s32 %v181, 64
    %v190 = vsel %vm186, %v188, %v174
    %v191 = vsel %vm187, %v189, %v181
    %vm192 = vcmp.lt.s32.totalorder %v190, 32
    %vm193 = vcmp.lt.s32.totalorder %v191, 32
    %v194 = vsel %vm192, 1, 0
    %v195 = vsel %vm193, 1, 0
    %vm196 = vcmp.eq.s32.totalorder %v194, 1
    %vm197 = vcmp.eq.s32.totalorder %v195, 1
    %v200 = vrot.slane %v161, 6
    %v201 = vrot.slane %v163, 6
    %v204 = vsel %vm196, %v157, %v200
    %v205 = vsel %vm197, %v159, %v201
    %v214 = vunpack.c.l.b16 %v83
    %v215 = vunpack.c.h.b16 %v83
    %v216 = vunpack.c.l.b16 %v84
    %v217 = vunpack.c.h.b16 %v84
    %v218 = vunpack.c.l.b16 %v85
    %v219 = vunpack.c.h.b16 %v85
    %v220 = vunpack.c.l.b16 %v86
    %v221 = vunpack.c.h.b16 %v86
    %v222 = vunpack.c.l.b16 %v87
    %v223 = vunpack.c.h.b16 %v87
    %v224 = vunpack.c.l.b16 %v88
    %v225 = vunpack.c.h.b16 %v88
    %v226 = vunpack.c.l.b16 %v89
    %v227 = vunpack.c.h.b16 %v89
    %v228 = vunpack.c.l.b16 %v90
    %v229 = vunpack.c.h.b16 %v90
    %v230 = vpack.c.b16 %v216, %v214
    %v231 = vpack.c.b16 %v217, %v215
    %v232 = vpack.c.b16 %v220, %v218
    %v233 = vpack.c.b16 %v221, %v219
    %v234 = vpack.c.b16 %v224, %v222
    %v235 = vpack.c.b16 %v225, %v223
    %v236 = vpack.c.b16 %v228, %v226
    %v237 = vpack.c.b16 %v229, %v227
    %vm246 = vcmask 523264
    %v248 = vsel %vm246, 0, 0
    %250 = vmatprep.subr.bf16.mxu0 0
    %251 = vmatpush1.bf16.msra.mxu0 0
    %252 = vmatprep.subr.bf16.mxu0 0
    %253 = vmatpush1.bf16.msra.mxu0 0
    %254 = vmatprep.subr.bf16.mxu0 0
    %255 = vmatpush1.bf16.msra.mxu0 0
    %256 = vmatprep.subr.bf16.mxu0 0
    %257 = vmatpush1.bf16.msra.mxu0 0
    %258 = vmatprep.subr.bf16.mxu0 %v237
    %259 = vmatpush1.bf16.msra.mxu0 %v236
    %260 = vmatprep.subr.bf16.mxu0 %v235
    %261 = vmatpush1.bf16.msra.mxu0 %v234
    %262 = vmatprep.subr.bf16.mxu0 %v233
    %263 = vmatpush1.bf16.msra.mxu0 %v232
    %264 = vmatprep.subr.bf16.mxu0 %v231
    %265 = vmatpush1.bf16.msra.mxu0 %v230
    %266 = vmatprep.subr.bf16.mxu0 0
    %267 = vmatpush2.bf16.msra.mxu0 0
    %268 = vmatprep.subr.bf16.mxu0 0
    %269 = vmatpush2.bf16.msra.mxu0 0
    %270 = vmatprep.subr.bf16.mxu0 0
    %271 = vmatpush2.bf16.msra.mxu0 0
    %272 = vmatprep.subr.bf16.mxu0 0
    %273 = vmatpush2.bf16.msra.mxu0 0
    %274 = vmatprep.subr.bf16.mxu0 0
    %275 = vmatpush2.bf16.msra.mxu0 0
    %276 = vmatprep.subr.bf16.mxu0 0
    %277 = vmatpush2.bf16.msra.mxu0 0
    %278 = vmatprep.subr.bf16.mxu0 0
    %279 = vmatpush2.bf16.msra.mxu0 0
    %280 = vmatprep.subr.bf16.mxu0 0
    %281 = vmatpush2.bf16.msra.mxu0 0
    %282 = vmatprep.mubr.bf16.mxu0 0
    %283 = vmatmul.mubr.bf16.gmra.mxu0 %v248
    %v284 = vpop.f32.mrf.mxu0
    %v285 = vadd.f32 0.0, %v284
    %v286 = vpop.f32.mrf.mxu0
    %v287 = vadd.f32 0.0, %v286
    %v288 = vpop.f32.mrf.mxu0
    %v289 = vpop.f32.mrf.mxu0
    %290 = vdwg.mxu0
    %v291 = vadd.f32 %v204, %v285
    %v292 = vxor.u32 %v291, 2147483648
    %v293 = vmul.f32 %v292, 1.442695
    %v294 = vpow.pop %v293
    %v295 = vadd.f32 %v294, 1.0
    %v296 = vrcp.pop %v295
    %v297 = vmul.f32 1.0, %v296
    %v299 = vlaneseq
    %v300 = vshrl.u32 %v299, 7
    %v301 = vsub.s32 0, %v300
    %v302 = vrot.slane %v91, %v301
    %v304 = vadd.f32 %v287, %v302
    %v305 = vmul.f32 %v297, %v304
    %v306 = vadd.f32 %v205, %v305
    %v307 = vtanh.pop %v306
    %v308 = vsub.f32 1.0, %v297
    %310 = vrot.lane.b32.xlu0 %v307, 64
    %v311 = vpop.permute.xlu0 %310
    %v313 = vmul.f32 %v308, %v311
    %v314 = vmul.f32 %v297, 0.0
    %v315 = vadd.f32 %v313, %v314
    %v316 = vrot.slane %v161, 2
    %v317 = vrot.slane %v163, 2
    %v320 = vsel %vm196, %v157, %v316
    %v321 = vsel %vm197, %v159, %v317
    %v322 = vpack.c.bf16 %v315, %v315
    %324 = vrot.lane.b32.xlu0 %v322, 64
    %v325 = vpop.permute.xlu0 %324
    %v327 = vsel %vm246, %v325, 0
    %329 = vmatprep.subr.bf16.mxu0 0
    %330 = vmatpush1.bf16.msra.mxu0 0
    %331 = vmatprep.subr.bf16.mxu0 0
    %332 = vmatpush1.bf16.msra.mxu0 0
    %333 = vmatprep.subr.bf16.mxu0 0
    %334 = vmatpush1.bf16.msra.mxu0 0
    %335 = vmatprep.subr.bf16.mxu0 0
    %336 = vmatpush1.bf16.msra.mxu0 0
    %337 = vmatprep.subr.bf16.mxu0 %v237
    %338 = vmatpush1.bf16.msra.mxu0 %v236
    %339 = vmatprep.subr.bf16.mxu0 %v235
    %340 = vmatpush1.bf16.msra.mxu0 %v234
    %341 = vmatprep.subr.bf16.mxu0 %v233
    %342 = vmatpush1.bf16.msra.mxu0 %v232
    %343 = vmatprep.subr.bf16.mxu0 %v231
    %344 = vmatpush1.bf16.msra.mxu0 %v230
    %345 = vmatprep.subr.bf16.mxu0 0
    %346 = vmatpush2.bf16.msra.mxu0 0
    %347 = vmatprep.subr.bf16.mxu0 0
    %348 = vmatpush2.bf16.msra.mxu0 0
    %349 = vmatprep.subr.bf16.mxu0 0
    %350 = vmatpush2.bf16.msra.mxu0 0
    %351 = vmatprep.subr.bf16.mxu0 0
    %352 = vmatpush2.bf16.msra.mxu0 0
    %353 = vmatprep.subr.bf16.mxu0 0
    %354 = vmatpush2.bf16.msra.mxu0 0
    %355 = vmatprep.subr.bf16.mxu0 0
    %356 = vmatpush2.bf16.msra.mxu0 0
    %357 = vmatprep.subr.bf16.mxu0 0
    %358 = vmatpush2.bf16.msra.mxu0 0
    %359 = vmatprep.subr.bf16.mxu0 0
    %360 = vmatpush2.bf16.msra.mxu0 0
    %361 = vmatprep.mubr.bf16.mxu0 0
    %362 = vmatmul.mubr.bf16.gmra.mxu0 %v327
    %v363 = vpop.f32.mrf.mxu0
    %v364 = vadd.f32 0.0, %v363
    %v365 = vpop.f32.mrf.mxu0
    %v366 = vadd.f32 0.0, %v365
    %v367 = vpop.f32.mrf.mxu0
    %v368 = vpop.f32.mrf.mxu0
    %369 = vdwg.mxu0
    %v371 = vrot.slane %v364, 6
    %v373 = vadd.f32 %v320, %v371
    %v374 = vxor.u32 %v373, 2147483648
    %v375 = vmul.f32 %v374, 1.442695
    %v376 = vpow.pop %v375
    %v377 = vadd.f32 %v376, 1.0
    %v378 = vrcp.pop %v377
    %v379 = vmul.f32 1.0, %v378
    %v380 = vadd.f32 %v366, %v302
    %v382 = vrot.slane %v380, 6
    %v384 = vmul.f32 %v379, %v382
    %v385 = vadd.f32 %v321, %v384
    %v386 = vtanh.pop %v385
    %v387 = vsub.f32 1.0, %v379
    %389 = vrot.lane.b32.xlu0 %v386, 64
    %v390 = vpop.permute.xlu0 %389
    %v392 = vmul.f32 %v387, %v390
    %v394 = vrot.slane %v315, 6
    %v396 = vmul.f32 %v379, %v394
    %v397 = vadd.f32 %v392, %v396
    %v398 = vpack.c.bf16 %v397, %v397
    %v400 = vrot.slane %v398, 1
    %401 = vrot.lane.b32.xlu0 %v400, 64
    %v402 = vpop.permute.xlu0 %401
    %v404 = vsel %vm246, %v402, 0
    %406 = vmatprep.subr.bf16.mxu0 0
    %407 = vmatpush1.bf16.msra.mxu0 0
    %408 = vmatprep.subr.bf16.mxu0 0
    %409 = vmatpush1.bf16.msra.mxu0 0
    %410 = vmatprep.subr.bf16.mxu0 0
    %411 = vmatpush1.bf16.msra.mxu0 0
    %412 = vmatprep.subr.bf16.mxu0 0
    %413 = vmatpush1.bf16.msra.mxu0 0
    %414 = vmatprep.subr.bf16.mxu0 %v237
    %415 = vmatpush1.bf16.msra.mxu0 %v236
    %416 = vmatprep.subr.bf16.mxu0 %v235
    %417 = vmatpush1.bf16.msra.mxu0 %v234
    %418 = vmatprep.subr.bf16.mxu0 %v233
    %419 = vmatpush1.bf16.msra.mxu0 %v232
    %420 = vmatprep.subr.bf16.mxu0 %v231
    %421 = vmatpush1.bf16.msra.mxu0 %v230
    %422 = vmatprep.subr.bf16.mxu0 0
    %423 = vmatpush2.bf16.msra.mxu0 0
    %424 = vmatprep.subr.bf16.mxu0 0
    %425 = vmatpush2.bf16.msra.mxu0 0
    %426 = vmatprep.subr.bf16.mxu0 0
    %427 = vmatpush2.bf16.msra.mxu0 0
    %428 = vmatprep.subr.bf16.mxu0 0
    %429 = vmatpush2.bf16.msra.mxu0 0
    %430 = vmatprep.subr.bf16.mxu0 0
    %431 = vmatpush2.bf16.msra.mxu0 0
    %432 = vmatprep.subr.bf16.mxu0 0
    %433 = vmatpush2.bf16.msra.mxu0 0
    %434 = vmatprep.subr.bf16.mxu0 0
    %435 = vmatpush2.bf16.msra.mxu0 0
    %436 = vmatprep.subr.bf16.mxu0 0
    %437 = vmatpush2.bf16.msra.mxu0 0
    %438 = vmatprep.mubr.bf16.mxu0 0
    %439 = vmatmul.mubr.bf16.gmra.mxu0 %v404
    %v440 = vpop.f32.mrf.mxu0
    %v441 = vadd.f32 0.0, %v440
    %v442 = vpop.f32.mrf.mxu0
    %v443 = vadd.f32 0.0, %v442
    %v444 = vpop.f32.mrf.mxu0
    %v445 = vpop.f32.mrf.mxu0
    %446 = vdwg.mxu0
    %v448 = vrot.slane %v441, 4
    %v450 = vadd.f32 %v204, %v448
    %v451 = vxor.u32 %v450, 2147483648
    %v452 = vmul.f32 %v451, 1.442695
    %v453 = vpow.pop %v452
    %v454 = vadd.f32 %v453, 1.0
    %v455 = vrcp.pop %v454
    %v456 = vmul.f32 1.0, %v455
    %v457 = vadd.f32 %v443, %v302
    %v459 = vrot.slane %v457, 4
    %v461 = vmul.f32 %v456, %v459
    %v462 = vadd.f32 %v205, %v461
    %v463 = vtanh.pop %v462
    %v464 = vsub.f32 1.0, %v456
    %466 = vrot.lane.b32.xlu0 %v463, 64
    %v467 = vpop.permute.xlu0 %466
    %v469 = vmul.f32 %v464, %v467
    %v471 = vrot.slane %v397, 6
    %v473 = vmul.f32 %v456, %v471
    %v474 = vadd.f32 %v469, %v473
    %v475 = vpack.c.bf16 %v474, %v474
    %v477 = vrot.slane %v475, 2
    %478 = vrot.lane.b32.xlu0 %v477, 64
    %v479 = vpop.permute.xlu0 %478
    %v481 = vsel %vm246, %v479, 0
    %483 = vmatprep.subr.bf16.mxu0 0
    %484 = vmatpush1.bf16.msra.mxu0 0
    %485 = vmatprep.subr.bf16.mxu0 0
    %486 = vmatpush1.bf16.msra.mxu0 0
    %487 = vmatprep.subr.bf16.mxu0 0
    %488 = vmatpush1.bf16.msra.mxu0 0
    %489 = vmatprep.subr.bf16.mxu0 0
    %490 = vmatpush1.bf16.msra.mxu0 0
    %491 = vmatprep.subr.bf16.mxu0 %v237
    %492 = vmatpush1.bf16.msra.mxu0 %v236
    %493 = vmatprep.subr.bf16.mxu0 %v235
    %494 = vmatpush1.bf16.msra.mxu0 %v234
    %495 = vmatprep.subr.bf16.mxu0 %v233
    %496 = vmatpush1.bf16.msra.mxu0 %v232
    %497 = vmatprep.subr.bf16.mxu0 %v231
    %498 = vmatpush1.bf16.msra.mxu0 %v230
    %499 = vmatprep.subr.bf16.mxu0 0
    %500 = vmatpush2.bf16.msra.mxu0 0
    %501 = vmatprep.subr.bf16.mxu0 0
    %502 = vmatpush2.bf16.msra.mxu0 0
    %503 = vmatprep.subr.bf16.mxu0 0
    %504 = vmatpush2.bf16.msra.mxu0 0
    %505 = vmatprep.subr.bf16.mxu0 0
    %506 = vmatpush2.bf16.msra.mxu0 0
    %507 = vmatprep.subr.bf16.mxu0 0
    %508 = vmatpush2.bf16.msra.mxu0 0
    %509 = vmatprep.subr.bf16.mxu0 0
    %510 = vmatpush2.bf16.msra.mxu0 0
    %511 = vmatprep.subr.bf16.mxu0 0
    %512 = vmatpush2.bf16.msra.mxu0 0
    %513 = vmatprep.subr.bf16.mxu0 0
    %514 = vmatpush2.bf16.msra.mxu0 0
    %515 = vmatprep.mubr.bf16.mxu0 0
    %516 = vmatmul.mubr.bf16.gmra.mxu0 %v481
    %v517 = vpop.f32.mrf.mxu0
    %v518 = vadd.f32 0.0, %v517
    %v519 = vpop.f32.mrf.mxu0
    %v520 = vadd.f32 0.0, %v519
    %v521 = vpop.f32.mrf.mxu0
    %v522 = vpop.f32.mrf.mxu0
    %523 = vdwg.mxu0
    %v525 = vrot.slane %v518, 2
    %v527 = vadd.f32 %v320, %v525
    %v528 = vxor.u32 %v527, 2147483648
    %v529 = vmul.f32 %v528, 1.442695
    %v530 = vpow.pop %v529
    %v531 = vadd.f32 %v530, 1.0
    %v532 = vrcp.pop %v531
    %v533 = vmul.f32 1.0, %v532
    %v534 = vadd.f32 %v520, %v302
    %v536 = vrot.slane %v534, 2
    %v538 = vmul.f32 %v533, %v536
    %v539 = vadd.f32 %v321, %v538
    %v540 = vtanh.pop %v539
    %v541 = vsub.f32 1.0, %v533
    %543 = vrot.lane.b32.xlu0 %v540, 64
    %v544 = vpop.permute.xlu0 %543
    %v546 = vmul.f32 %v541, %v544
    %v548 = vrot.slane %v474, 6
    %v550 = vmul.f32 %v533, %v548
    %v551 = vadd.f32 %v546, %v550
    %v554 = vrot.slane %v157, 6
    %v555 = vrot.slane %v159, 6
    %v558 = vsel %vm196, %v161, %v554
    %v559 = vsel %vm197, %v163, %v555
    %v560 = vpack.c.bf16 %v551, %v551
    %v562 = vrot.slane %v560, 3
    %563 = vrot.lane.b32.xlu0 %v562, 64
    %v564 = vpop.permute.xlu0 %563
    %v566 = vsel %vm246, %v564, 0
    %568 = vmatprep.subr.bf16.mxu0 0
    %569 = vmatpush1.bf16.msra.mxu0 0
    %570 = vmatprep.subr.bf16.mxu0 0
    %571 = vmatpush1.bf16.msra.mxu0 0
    %572 = vmatprep.subr.bf16.mxu0 0
    %573 = vmatpush1.bf16.msra.mxu0 0
    %574 = vmatprep.subr.bf16.mxu0 0
    %575 = vmatpush1.bf16.msra.mxu0 0
    %576 = vmatprep.subr.bf16.mxu0 %v237
    %577 = vmatpush1.bf16.msra.mxu0 %v236
    %578 = vmatprep.subr.bf16.mxu0 %v235
    %579 = vmatpush1.bf16.msra.mxu0 %v234
    %580 = vmatprep.subr.bf16.mxu0 %v233
    %581 = vmatpush1.bf16.msra.mxu0 %v232
    %582 = vmatprep.subr.bf16.mxu0 %v231
    %583 = vmatpush1.bf16.msra.mxu0 %v230
    %584 = vmatprep.subr.bf16.mxu0 0
    %585 = vmatpush2.bf16.msra.mxu0 0
    %586 = vmatprep.subr.bf16.mxu0 0
    %587 = vmatpush2.bf16.msra.mxu0 0
    %588 = vmatprep.subr.bf16.mxu0 0
    %589 = vmatpush2.bf16.msra.mxu0 0
    %590 = vmatprep.subr.bf16.mxu0 0
    %591 = vmatpush2.bf16.msra.mxu0 0
    %592 = vmatprep.subr.bf16.mxu0 0
    %593 = vmatpush2.bf16.msra.mxu0 0
    %594 = vmatprep.subr.bf16.mxu0 0
    %595 = vmatpush2.bf16.msra.mxu0 0
    %596 = vmatprep.subr.bf16.mxu0 0
    %597 = vmatpush2.bf16.msra.mxu0 0
    %598 = vmatprep.subr.bf16.mxu0 0
    %599 = vmatpush2.bf16.msra.mxu0 0
    %600 = vmatprep.mubr.bf16.mxu0 0
    %601 = vmatmul.mubr.bf16.gmra.mxu0 %v566
    %v602 = vpop.f32.mrf.mxu0
    %v603 = vadd.f32 0.0, %v602
    %v604 = vpop.f32.mrf.mxu0
    %v605 = vadd.f32 0.0, %v604
    %v606 = vpop.f32.mrf.mxu0
    %v607 = vpop.f32.mrf.mxu0
    %608 = vdwg.mxu0
    %v609 = vadd.f32 %v558, %v603
    %v610 = vxor.u32 %v609, 2147483648
    %v611 = vmul.f32 %v610, 1.442695
    %v612 = vpow.pop %v611
    %v613 = vadd.f32 %v612, 1.0
    %v614 = vrcp.pop %v613
    %v615 = vmul.f32 1.0, %v614
    %v616 = vadd.f32 %v605, %v302
    %v617 = vmul.f32 %v615, %v616
    %v618 = vadd.f32 %v559, %v617
    %v619 = vtanh.pop %v618
    %v620 = vsub.f32 1.0, %v615
    %622 = vrot.lane.b32.xlu0 %v619, 64
    %v623 = vpop.permute.xlu0 %622
    %v625 = vmul.f32 %v620, %v623
    %v627 = vrot.slane %v551, 6
    %v629 = vmul.f32 %v615, %v627
    %v630 = vadd.f32 %v625, %v629
    %v631 = vrot.slane %v157, 2
    %v632 = vrot.slane %v159, 2
    %v635 = vsel %vm196, %v161, %v631
    %v636 = vsel %vm197, %v163, %v632
    %v637 = vpack.c.bf16 %v630, %v630
    %639 = vrot.lane.b32.xlu0 %v637, 64
    %v640 = vpop.permute.xlu0 %639
    %v642 = vsel %vm246, %v640, 0
    %644 = vmatprep.subr.bf16.mxu0 0
    %645 = vmatpush1.bf16.msra.mxu0 0
    %646 = vmatprep.subr.bf16.mxu0 0
    %647 = vmatpush1.bf16.msra.mxu0 0
    %648 = vmatprep.subr.bf16.mxu0 0
    %649 = vmatpush1.bf16.msra.mxu0 0
    %650 = vmatprep.subr.bf16.mxu0 0
    %651 = vmatpush1.bf16.msra.mxu0 0
    %652 = vmatprep.subr.bf16.mxu0 %v237
    %653 = vmatpush1.bf16.msra.mxu0 %v236
    %654 = vmatprep.subr.bf16.mxu0 %v235
    %655 = vmatpush1.bf16.msra.mxu0 %v234
    %656 = vmatprep.subr.bf16.mxu0 %v233
    %657 = vmatpush1.bf16.msra.mxu0 %v232
    %658 = vmatprep.subr.bf16.mxu0 %v231
    %659 = vmatpush1.bf16.msra.mxu0 %v230
    %660 = vmatprep.subr.bf16.mxu0 0
    %661 = vmatpush2.bf16.msra.mxu0 0
    %662 = vmatprep.subr.bf16.mxu0 0
    %663 = vmatpush2.bf16.msra.mxu0 0
    %664 = vmatprep.subr.bf16.mxu0 0
    %665 = vmatpush2.bf16.msra.mxu0 0
    %666 = vmatprep.subr.bf16.mxu0 0
    %667 = vmatpush2.bf16.msra.mxu0 0
    %668 = vmatprep.subr.bf16.mxu0 0
    %669 = vmatpush2.bf16.msra.mxu0 0
    %670 = vmatprep.subr.bf16.mxu0 0
    %671 = vmatpush2.bf16.msra.mxu0 0
    %672 = vmatprep.subr.bf16.mxu0 0
    %673 = vmatpush2.bf16.msra.mxu0 0
    %674 = vmatprep.subr.bf16.mxu0 0
    %675 = vmatpush2.bf16.msra.mxu0 0
    %676 = vmatprep.mubr.bf16.mxu0 0
    %677 = vmatmul.mubr.bf16.gmra.mxu0 %v642
    %v678 = vpop.f32.mrf.mxu0
    %v679 = vadd.f32 0.0, %v678
    %v680 = vpop.f32.mrf.mxu0
    %v681 = vadd.f32 0.0, %v680
    %v682 = vpop.f32.mrf.mxu0
    %v683 = vpop.f32.mrf.mxu0
    %684 = vdwg.mxu0
    %v686 = vrot.slane %v679, 6
    %v688 = vadd.f32 %v635, %v686
    %v689 = vxor.u32 %v688, 2147483648
    %v690 = vmul.f32 %v689, 1.442695
    %v691 = vpow.pop %v690
    %v692 = vadd.f32 %v691, 1.0
    %v693 = vrcp.pop %v692
    %v694 = vmul.f32 1.0, %v693
    %v695 = vadd.f32 %v681, %v302
    %v697 = vrot.slane %v695, 6
    %v699 = vmul.f32 %v694, %v697
    %v700 = vadd.f32 %v636, %v699
    %v701 = vtanh.pop %v700
    %v702 = vsub.f32 1.0, %v694
    %704 = vrot.lane.b32.xlu0 %v701, 64
    %v705 = vpop.permute.xlu0 %704
    %v707 = vmul.f32 %v702, %v705
    %v709 = vrot.slane %v630, 6
    %v711 = vmul.f32 %v694, %v709
    %v712 = vadd.f32 %v707, %v711
    %v713 = vpack.c.bf16 %v712, %v712
    %v715 = vrot.slane %v713, 1
    %716 = vrot.lane.b32.xlu0 %v715, 64
    %v717 = vpop.permute.xlu0 %716
    %v719 = vsel %vm246, %v717, 0
    %721 = vmatprep.subr.bf16.mxu0 0
    %722 = vmatpush1.bf16.msra.mxu0 0
    %723 = vmatprep.subr.bf16.mxu0 0
    %724 = vmatpush1.bf16.msra.mxu0 0
    %725 = vmatprep.subr.bf16.mxu0 0
    %726 = vmatpush1.bf16.msra.mxu0 0
    %727 = vmatprep.subr.bf16.mxu0 0
    %728 = vmatpush1.bf16.msra.mxu0 0
    %729 = vmatprep.subr.bf16.mxu0 %v237
    %730 = vmatpush1.bf16.msra.mxu0 %v236
    %731 = vmatprep.subr.bf16.mxu0 %v235
    %732 = vmatpush1.bf16.msra.mxu0 %v234
    %733 = vmatprep.subr.bf16.mxu0 %v233
    %734 = vmatpush1.bf16.msra.mxu0 %v232
    %735 = vmatprep.subr.bf16.mxu0 %v231
    %736 = vmatpush1.bf16.msra.mxu0 %v230
    %737 = vmatprep.subr.bf16.mxu0 0
    %738 = vmatpush2.bf16.msra.mxu0 0
    %739 = vmatprep.subr.bf16.mxu0 0
    %740 = vmatpush2.bf16.msra.mxu0 0
    %741 = vmatprep.subr.bf16.mxu0 0
    %742 = vmatpush2.bf16.msra.mxu0 0
    %743 = vmatprep.subr.bf16.mxu0 0
    %744 = vmatpush2.bf16.msra.mxu0 0
    %745 = vmatprep.subr.bf16.mxu0 0
    %746 = vmatpush2.bf16.msra.mxu0 0
    %747 = vmatprep.subr.bf16.mxu0 0
    %748 = vmatpush2.bf16.msra.mxu0 0
    %749 = vmatprep.subr.bf16.mxu0 0
    %750 = vmatpush2.bf16.msra.mxu0 0
    %751 = vmatprep.subr.bf16.mxu0 0
    %752 = vmatpush2.bf16.msra.mxu0 0
    %753 = vmatprep.mubr.bf16.mxu0 0
    %754 = vmatmul.mubr.bf16.gmra.mxu0 %v719
    %v755 = vpop.f32.mrf.mxu0
    %v756 = vadd.f32 0.0, %v755
    %v757 = vpop.f32.mrf.mxu0
    %v758 = vadd.f32 0.0, %v757
    %v759 = vpop.f32.mrf.mxu0
    %v760 = vpop.f32.mrf.mxu0
    %761 = vdwg.mxu0
    %v763 = vrot.slane %v756, 4
    %v765 = vadd.f32 %v558, %v763
    %v766 = vxor.u32 %v765, 2147483648
    %v767 = vmul.f32 %v766, 1.442695
    %v768 = vpow.pop %v767
    %v769 = vadd.f32 %v768, 1.0
    %v770 = vrcp.pop %v769
    %v771 = vmul.f32 1.0, %v770
    %v772 = vadd.f32 %v758, %v302
    %v774 = vrot.slane %v772, 4
    %v776 = vmul.f32 %v771, %v774
    %v777 = vadd.f32 %v559, %v776
    %v778 = vtanh.pop %v777
    %v779 = vsub.f32 1.0, %v771
    %781 = vrot.lane.b32.xlu0 %v778, 64
    %v782 = vpop.permute.xlu0 %781
    %v784 = vmul.f32 %v779, %v782
    %v786 = vrot.slane %v712, 6
    %v788 = vmul.f32 %v771, %v786
    %v789 = vadd.f32 %v784, %v788
    %v790 = vpack.c.bf16 %v789, %v789
    %v792 = vrot.slane %v790, 2
    %793 = vrot.lane.b32.xlu0 %v792, 64
    %v794 = vpop.permute.xlu0 %793
    %v796 = vsel %vm246, %v794, 0
    %798 = vmatprep.subr.bf16.mxu0 0
    %799 = vmatpush1.bf16.msra.mxu0 0
    %800 = vmatprep.subr.bf16.mxu0 0
    %801 = vmatpush1.bf16.msra.mxu0 0
    %802 = vmatprep.subr.bf16.mxu0 0
    %803 = vmatpush1.bf16.msra.mxu0 0
    %804 = vmatprep.subr.bf16.mxu0 0
    %805 = vmatpush1.bf16.msra.mxu0 0
    %806 = vmatprep.subr.bf16.mxu0 %v237
    %807 = vmatpush1.bf16.msra.mxu0 %v236
    %808 = vmatprep.subr.bf16.mxu0 %v235
    %809 = vmatpush1.bf16.msra.mxu0 %v234
    %810 = vmatprep.subr.bf16.mxu0 %v233
    %811 = vmatpush1.bf16.msra.mxu0 %v232
    %812 = vmatprep.subr.bf16.mxu0 %v231
    %813 = vmatpush1.bf16.msra.mxu0 %v230
    %814 = vmatprep.subr.bf16.mxu0 0
    %815 = vmatpush2.bf16.msra.mxu0 0
    %816 = vmatprep.subr.bf16.mxu0 0
    %817 = vmatpush2.bf16.msra.mxu0 0
    %818 = vmatprep.subr.bf16.mxu0 0
    %819 = vmatpush2.bf16.msra.mxu0 0
    %820 = vmatprep.subr.bf16.mxu0 0
    %821 = vmatpush2.bf16.msra.mxu0 0
    %822 = vmatprep.subr.bf16.mxu0 0
    %823 = vmatpush2.bf16.msra.mxu0 0
    %824 = vmatprep.subr.bf16.mxu0 0
    %825 = vmatpush2.bf16.msra.mxu0 0
    %826 = vmatprep.subr.bf16.mxu0 0
    %827 = vmatpush2.bf16.msra.mxu0 0
    %828 = vmatprep.subr.bf16.mxu0 0
    %829 = vmatpush2.bf16.msra.mxu0 0
    %830 = vmatprep.mubr.bf16.mxu0 0
    %831 = vmatmul.mubr.bf16.gmra.mxu0 %v796
    %v832 = vpop.f32.mrf.mxu0
    %v833 = vadd.f32 0.0, %v832
    %v834 = vpop.f32.mrf.mxu0
    %v835 = vadd.f32 0.0, %v834
    %v836 = vpop.f32.mrf.mxu0
    %v837 = vpop.f32.mrf.mxu0
    %838 = vdwg.mxu0
    %v840 = vrot.slane %v833, 2
    %v842 = vadd.f32 %v635, %v840
    %v843 = vxor.u32 %v842, 2147483648
    %v844 = vmul.f32 %v843, 1.442695
    %v845 = vpow.pop %v844
    %v846 = vadd.f32 %v845, 1.0
    %v847 = vrcp.pop %v846
    %v848 = vmul.f32 1.0, %v847
    %v849 = vadd.f32 %v835, %v302
    %v851 = vrot.slane %v849, 2
    %v853 = vmul.f32 %v848, %v851
    %v854 = vadd.f32 %v636, %v853
    %v855 = vtanh.pop %v854
    %v856 = vsub.f32 1.0, %v848
    %858 = vrot.lane.b32.xlu0 %v855, 64
    %v859 = vpop.permute.xlu0 %858
    %v861 = vmul.f32 %v856, %v859
    %v863 = vrot.slane %v789, 6
    %v865 = vmul.f32 %v848, %v863
    %v866 = vadd.f32 %v861, %v865
    %vm867 = vcmask 1041408
    %v868 = vsel %vm867, %v315, %v397
    %vm869 = vcmask 1043456
    %v870 = vsel %vm869, %v868, %v474
    %vm871 = vcmask 1045504
    %v872 = vsel %vm871, %v870, %v551
    %v873 = vsel %vm867, %v630, %v712
    %v874 = vsel %vm869, %v873, %v789
    %v875 = vsel %vm871, %v874, %v866
    %v877 = vrot.slane %v866, 6
    %v879 = vrot.slane %v789, 2
    %v881 = vrot.slane %v630, 2
    %v883 = vrot.slane %v474, 2
    %v885 = vrot.slane %v315, 2
    %v887 = vsel %vm867, %v877, %v879
    %v888 = vsel %vm869, %v887, %v786
    %v889 = vsel %vm871, %v888, %v881
    %v890 = vsel %vm867, %v627, %v883
    %v891 = vsel %vm869, %v890, %v471
    %v892 = vsel %vm871, %v891, %v885
    %895 = vrot.lane.b32.xlu0 %v872, 64
    %v896 = vpop.permute.xlu0 %895
    %897 = vrot.lane.b32.xlu0 %v875, 64
    %v898 = vpop.permute.xlu0 %897
    %903 = vrot.lane.b32.xlu0 %v889, 64
    %v904 = vpop.permute.xlu0 %903
    %905 = vrot.lane.b32.xlu0 %v892, 64
    %v906 = vpop.permute.xlu0 %905
    %vm909 = vcmask 261120
    %v910 = vsel %vm909, %v896, %v904
    %v911 = vsel %vm909, %v898, %v906
    %v912 = vpack.c.bf16 %v911, %v910
    %v913 = vld [vmem:[#allocation3] sm:$0xff]
    %v914 = vld [vmem:[#allocation3 + $0x8] sm:$0xff]
    %v915 = vld [vmem:[#allocation3 + $0x10] sm:$0xff]
    %v916 = vld [vmem:[#allocation3 + $0x18] sm:$0xff]
    %v917 = vld [vmem:[#allocation3 + $0x20] sm:$0xff]
    %v918 = vld [vmem:[#allocation3 + $0x28] sm:$0xff]
    %v919 = vld [vmem:[#allocation3 + $0x30] sm:$0xff]
    %v920 = vld [vmem:[#allocation3 + $0x38] sm:$0xff]
    %v921 = vld [vmem:[%s6] sm:$0x3]
    %v922 = vld [vmem:[#allocation6] sm:$0xff]
    %v923 = vld [vmem:[#allocation6 + $0x8] sm:$0xff]
    %v924 = vld [vmem:[#allocation6 + $0x10] sm:$0xff]
    %v925 = vld [vmem:[#allocation6 + $0x18] sm:$0xff]
    %v926 = vld [vmem:[#allocation6 + $0x20] sm:$0xff]
    %v927 = vld [vmem:[#allocation6 + $0x28] sm:$0xff]
    %v928 = vld [vmem:[#allocation6 + $0x30] sm:$0xff]
    %v929 = vld [vmem:[#allocation6 + $0x38] sm:$0xff]
    %v930 = vld [vmem:[%s8] sm:$0x1]
    %v932 = vlaneseq
    %v933 = vshrl.u32 %v932, 7
    %v934 = vsub.s32 0, %v933
    %v935 = vrot.slane %v921, %v934
    %v936 = vlaneseq
    %v937 = vshrl.u32 %v936, 7
    %v938 = vsub.s32 1, %v937
    %v939 = vrot.slane %v921, %v938
    %v950 = vunpack.c.l.b16 %v913
    %v951 = vunpack.c.h.b16 %v913
    %v952 = vunpack.c.l.b16 %v914
    %v953 = vunpack.c.h.b16 %v914
    %v954 = vunpack.c.l.b16 %v915
    %v955 = vunpack.c.h.b16 %v915
    %v956 = vunpack.c.l.b16 %v916
    %v957 = vunpack.c.h.b16 %v916
    %v958 = vunpack.c.l.b16 %v917
    %v959 = vunpack.c.h.b16 %v917
    %v960 = vunpack.c.l.b16 %v918
    %v961 = vunpack.c.h.b16 %v918
    %v962 = vunpack.c.l.b16 %v919
    %v963 = vunpack.c.h.b16 %v919
    %v964 = vunpack.c.l.b16 %v920
    %v965 = vunpack.c.h.b16 %v920
    %v966 = vpack.c.b16 %v952, %v950
    %v967 = vpack.c.b16 %v953, %v951
    %v968 = vpack.c.b16 %v956, %v954
    %v969 = vpack.c.b16 %v957, %v955
    %v970 = vpack.c.b16 %v960, %v958
    %v971 = vpack.c.b16 %v961, %v959
    %v972 = vpack.c.b16 %v964, %v962
    %v973 = vpack.c.b16 %v965, %v963
    %v983 = vsel %vm246, %v912, 0
    %985 = vmatprep.subr.bf16.mxu0 0
    %986 = vmatpush1.bf16.msra.mxu0 0
    %987 = vmatprep.subr.bf16.mxu0 0
    %988 = vmatpush1.bf16.msra.mxu0 0
    %989 = vmatprep.subr.bf16.mxu0 0
    %990 = vmatpush1.bf16.msra.mxu0 0
    %991 = vmatprep.subr.bf16.mxu0 0
    %992 = vmatpush1.bf16.msra.mxu0 0
    %993 = vmatprep.subr.bf16.mxu0 %v973
    %994 = vmatpush1.bf16.msra.mxu0 %v972
    %995 = vmatprep.subr.bf16.mxu0 %v971
    %996 = vmatpush1.bf16.msra.mxu0 %v970
    %997 = vmatprep.subr.bf16.mxu0 %v969
    %998 = vmatpush1.bf16.msra.mxu0 %v968
    %999 = vmatprep.subr.bf16.mxu0 %v967
    %1000 = vmatpush1.bf16.msra.mxu0 %v966
    %1001 = vmatprep.subr.bf16.mxu0 0
    %1002 = vmatpush2.bf16.msra.mxu0 0
    %1003 = vmatprep.subr.bf16.mxu0 0
    %1004 = vmatpush2.bf16.msra.mxu0 0
    %1005 = vmatprep.subr.bf16.mxu0 0
    %1006 = vmatpush2.bf16.msra.mxu0 0
    %1007 = vmatprep.subr.bf16.mxu0 0
    %1008 = vmatpush2.bf16.msra.mxu0 0
    %1009 = vmatprep.subr.bf16.mxu0 0
    %1010 = vmatpush2.bf16.msra.mxu0 0
    %1011 = vmatprep.subr.bf16.mxu0 0
    %1012 = vmatpush2.bf16.msra.mxu0 0
    %1013 = vmatprep.subr.bf16.mxu0 0
    %1014 = vmatpush2.bf16.msra.mxu0 0
    %1015 = vmatprep.subr.bf16.mxu0 0
    %1016 = vmatpush2.bf16.msra.mxu0 0
    %1017 = vmatprep.mubr.bf16.mxu0 0
    %1018 = vmatmul.mubr.bf16.gmra.mxu0 %v983
    %v1019 = vpop.f32.mrf.mxu0
    %v1020 = vadd.f32 %v935, %v1019
    %v1021 = vpop.f32.mrf.mxu0
    %v1022 = vadd.f32 %v939, %v1021
    %v1023 = vpop.f32.mrf.mxu0
    %v1024 = vadd.f32 %v935, %v1023
    %v1025 = vpop.f32.mrf.mxu0
    %v1026 = vadd.f32 %v939, %v1025
    %1027 = vdwg.mxu0
    %v1030 = vrot.slane %v1024, 6
    %v1031 = vrot.slane %v1026, 6
    %v1034 = vsel %vm196, %v1020, %v1030
    %v1035 = vsel %vm197, %v1022, %v1031
    %v1044 = vunpack.c.l.b16 %v922
    %v1045 = vunpack.c.h.b16 %v922
    %v1046 = vunpack.c.l.b16 %v923
    %v1047 = vunpack.c.h.b16 %v923
    %v1048 = vunpack.c.l.b16 %v924
    %v1049 = vunpack.c.h.b16 %v924
    %v1050 = vunpack.c.l.b16 %v925
    %v1051 = vunpack.c.h.b16 %v925
    %v1052 = vunpack.c.l.b16 %v926
    %v1053 = vunpack.c.h.b16 %v926
    %v1054 = vunpack.c.l.b16 %v927
    %v1055 = vunpack.c.h.b16 %v927
    %v1056 = vunpack.c.l.b16 %v928
    %v1057 = vunpack.c.h.b16 %v928
    %v1058 = vunpack.c.l.b16 %v929
    %v1059 = vunpack.c.h.b16 %v929
    %v1060 = vpack.c.b16 %v1046, %v1044
    %v1061 = vpack.c.b16 %v1047, %v1045
    %v1062 = vpack.c.b16 %v1050, %v1048
    %v1063 = vpack.c.b16 %v1051, %v1049
    %v1064 = vpack.c.b16 %v1054, %v1052
    %v1065 = vpack.c.b16 %v1055, %v1053
    %v1066 = vpack.c.b16 %v1058, %v1056
    %v1067 = vpack.c.b16 %v1059, %v1057
    %1076 = vmatprep.subr.bf16.mxu0 0
    %1077 = vmatpush1.bf16.msra.mxu0 0
    %1078 = vmatprep.subr.bf16.mxu0 0
    %1079 = vmatpush1.bf16.msra.mxu0 0
    %1080 = vmatprep.subr.bf16.mxu0 0
    %1081 = vmatpush1.bf16.msra.mxu0 0
    %1082 = vmatprep.subr.bf16.mxu0 0
    %1083 = vmatpush1.bf16.msra.mxu0 0
    %1084 = vmatprep.subr.bf16.mxu0 %v1067
    %1085 = vmatpush1.bf16.msra.mxu0 %v1066
    %1086 = vmatprep.subr.bf16.mxu0 %v1065
    %1087 = vmatpush1.bf16.msra.mxu0 %v1064
    %1088 = vmatprep.subr.bf16.mxu0 %v1063
    %1089 = vmatpush1.bf16.msra.mxu0 %v1062
    %1090 = vmatprep.subr.bf16.mxu0 %v1061
    %1091 = vmatpush1.bf16.msra.mxu0 %v1060
    %1092 = vmatprep.subr.bf16.mxu0 0
    %1093 = vmatpush2.bf16.msra.mxu0 0
    %1094 = vmatprep.subr.bf16.mxu0 0
    %1095 = vmatpush2.bf16.msra.mxu0 0
    %1096 = vmatprep.subr.bf16.mxu0 0
    %1097 = vmatpush2.bf16.msra.mxu0 0
    %1098 = vmatprep.subr.bf16.mxu0 0
    %1099 = vmatpush2.bf16.msra.mxu0 0
    %1100 = vmatprep.subr.bf16.mxu0 0
    %1101 = vmatpush2.bf16.msra.mxu0 0
    %1102 = vmatprep.subr.bf16.mxu0 0
    %1103 = vmatpush2.bf16.msra.mxu0 0
    %1104 = vmatprep.subr.bf16.mxu0 0
    %1105 = vmatpush2.bf16.msra.mxu0 0
    %1106 = vmatprep.subr.bf16.mxu0 0
    %1107 = vmatpush2.bf16.msra.mxu0 0
    %1108 = vmatprep.mubr.bf16.mxu0 0
    %1109 = vmatmul.mubr.bf16.gmra.mxu0 %v248
    %v1110 = vpop.f32.mrf.mxu0
    %v1111 = vadd.f32 0.0, %v1110
    %v1112 = vpop.f32.mrf.mxu0
    %v1113 = vadd.f32 0.0, %v1112
    %v1114 = vpop.f32.mrf.mxu0
    %v1115 = vpop.f32.mrf.mxu0
    %1116 = vdwg.mxu0
    %v1117 = vadd.f32 %v1034, %v1111
    %v1118 = vxor.u32 %v1117, 2147483648
    %v1119 = vmul.f32 %v1118, 1.442695
    %v1120 = vpow.pop %v1119
    %v1121 = vadd.f32 %v1120, 1.0
    %v1122 = vrcp.pop %v1121
    %v1123 = vmul.f32 1.0, %v1122
    %v1125 = vlaneseq
    %v1126 = vshrl.u32 %v1125, 7
    %v1127 = vsub.s32 0, %v1126
    %v1128 = vrot.slane %v930, %v1127
    %v1130 = vadd.f32 %v1113, %v1128
    %v1131 = vmul.f32 %v1123, %v1130
    %v1132 = vadd.f32 %v1035, %v1131
    %v1133 = vtanh.pop %v1132
    %v1134 = vsub.f32 1.0, %v1123
    %1136 = vrot.lane.b32.xlu0 %v1133, 64
    %v1137 = vpop.permute.xlu0 %1136
    %v1139 = vmul.f32 %v1134, %v1137
    %v1140 = vmul.f32 %v1123, 0.0
    %v1141 = vadd.f32 %v1139, %v1140
    %v1142 = vrot.slane %v1024, 2
    %v1143 = vrot.slane %v1026, 2
    %v1146 = vsel %vm196, %v1020, %v1142
    %v1147 = vsel %vm197, %v1022, %v1143
    %v1148 = vpack.c.bf16 %v1141, %v1141
    %1150 = vrot.lane.b32.xlu0 %v1148, 64
    %v1151 = vpop.permute.xlu0 %1150
    %v1153 = vsel %vm246, %v1151, 0
    %1155 = vmatprep.subr.bf16.mxu0 0
    %1156 = vmatpush1.bf16.msra.mxu0 0
    %1157 = vmatprep.subr.bf16.mxu0 0
    %1158 = vmatpush1.bf16.msra.mxu0 0
    %1159 = vmatprep.subr.bf16.mxu0 0
    %1160 = vmatpush1.bf16.msra.mxu0 0
    %1161 = vmatprep.subr.bf16.mxu0 0
    %1162 = vmatpush1.bf16.msra.mxu0 0
    %1163 = vmatprep.subr.bf16.mxu0 %v1067
    %1164 = vmatpush1.bf16.msra.mxu0 %v1066
    %1165 = vmatprep.subr.bf16.mxu0 %v1065
    %1166 = vmatpush1.bf16.msra.mxu0 %v1064
    %1167 = vmatprep.subr.bf16.mxu0 %v1063
    %1168 = vmatpush1.bf16.msra.mxu0 %v1062
    %1169 = vmatprep.subr.bf16.mxu0 %v1061
    %1170 = vmatpush1.bf16.msra.mxu0 %v1060
    %1171 = vmatprep.subr.bf16.mxu0 0
    %1172 = vmatpush2.bf16.msra.mxu0 0
    %1173 = vmatprep.subr.bf16.mxu0 0
    %1174 = vmatpush2.bf16.msra.mxu0 0
    %1175 = vmatprep.subr.bf16.mxu0 0
    %1176 = vmatpush2.bf16.msra.mxu0 0
    %1177 = vmatprep.subr.bf16.mxu0 0
    %1178 = vmatpush2.bf16.msra.mxu0 0
    %1179 = vmatprep.subr.bf16.mxu0 0
    %1180 = vmatpush2.bf16.msra.mxu0 0
    %1181 = vmatprep.subr.bf16.mxu0 0
    %1182 = vmatpush2.bf16.msra.mxu0 0
    %1183 = vmatprep.subr.bf16.mxu0 0
    %1184 = vmatpush2.bf16.msra.mxu0 0
    %1185 = vmatprep.subr.bf16.mxu0 0
    %1186 = vmatpush2.bf16.msra.mxu0 0
    %1187 = vmatprep.mubr.bf16.mxu0 0
    %1188 = vmatmul.mubr.bf16.gmra.mxu0 %v1153
    %v1189 = vpop.f32.mrf.mxu0
    %v1190 = vadd.f32 0.0, %v1189
    %v1191 = vpop.f32.mrf.mxu0
    %v1192 = vadd.f32 0.0, %v1191
    %v1193 = vpop.f32.mrf.mxu0
    %v1194 = vpop.f32.mrf.mxu0
    %1195 = vdwg.mxu0
    %v1197 = vrot.slane %v1190, 6
    %v1199 = vadd.f32 %v1146, %v1197
    %v1200 = vxor.u32 %v1199, 2147483648
    %v1201 = vmul.f32 %v1200, 1.442695
    %v1202 = vpow.pop %v1201
    %v1203 = vadd.f32 %v1202, 1.0
    %v1204 = vrcp.pop %v1203
    %v1205 = vmul.f32 1.0, %v1204
    %v1206 = vadd.f32 %v1192, %v1128
    %v1208 = vrot.slane %v1206, 6
    %v1210 = vmul.f32 %v1205, %v1208
    %v1211 = vadd.f32 %v1147, %v1210
    %v1212 = vtanh.pop %v1211
    %v1213 = vsub.f32 1.0, %v1205
    %1215 = vrot.lane.b32.xlu0 %v1212, 64
    %v1216 = vpop.permute.xlu0 %1215
    %v1218 = vmul.f32 %v1213, %v1216
    %v1220 = vrot.slane %v1141, 6
    %v1222 = vmul.f32 %v1205, %v1220
    %v1223 = vadd.f32 %v1218, %v1222
    %v1224 = vpack.c.bf16 %v1223, %v1223
    %v1226 = vrot.slane %v1224, 1
    %1227 = vrot.lane.b32.xlu0 %v1226, 64
    %v1228 = vpop.permute.xlu0 %1227
    %v1230 = vsel %vm246, %v1228, 0
    %1232 = vmatprep.subr.bf16.mxu0 0
    %1233 = vmatpush1.bf16.msra.mxu0 0
    %1234 = vmatprep.subr.bf16.mxu0 0
    %1235 = vmatpush1.bf16.msra.mxu0 0
    %1236 = vmatprep.subr.bf16.mxu0 0
    %1237 = vmatpush1.bf16.msra.mxu0 0
    %1238 = vmatprep.subr.bf16.mxu0 0
    %1239 = vmatpush1.bf16.msra.mxu0 0
    %1240 = vmatprep.subr.bf16.mxu0 %v1067
    %1241 = vmatpush1.bf16.msra.mxu0 %v1066
    %1242 = vmatprep.subr.bf16.mxu0 %v1065
    %1243 = vmatpush1.bf16.msra.mxu0 %v1064
    %1244 = vmatprep.subr.bf16.mxu0 %v1063
    %1245 = vmatpush1.bf16.msra.mxu0 %v1062
    %1246 = vmatprep.subr.bf16.mxu0 %v1061
    %1247 = vmatpush1.bf16.msra.mxu0 %v1060
    %1248 = vmatprep.subr.bf16.mxu0 0
    %1249 = vmatpush2.bf16.msra.mxu0 0
    %1250 = vmatprep.subr.bf16.mxu0 0
    %1251 = vmatpush2.bf16.msra.mxu0 0
    %1252 = vmatprep.subr.bf16.mxu0 0
    %1253 = vmatpush2.bf16.msra.mxu0 0
    %1254 = vmatprep.subr.bf16.mxu0 0
    %1255 = vmatpush2.bf16.msra.mxu0 0
    %1256 = vmatprep.subr.bf16.mxu0 0
    %1257 = vmatpush2.bf16.msra.mxu0 0
    %1258 = vmatprep.subr.bf16.mxu0 0
    %1259 = vmatpush2.bf16.msra.mxu0 0
    %1260 = vmatprep.subr.bf16.mxu0 0
    %1261 = vmatpush2.bf16.msra.mxu0 0
    %1262 = vmatprep.subr.bf16.mxu0 0
    %1263 = vmatpush2.bf16.msra.mxu0 0
    %1264 = vmatprep.mubr.bf16.mxu0 0
    %1265 = vmatmul.mubr.bf16.gmra.mxu0 %v1230
    %v1266 = vpop.f32.mrf.mxu0
    %v1267 = vadd.f32 0.0, %v1266
    %v1268 = vpop.f32.mrf.mxu0
    %v1269 = vadd.f32 0.0, %v1268
    %v1270 = vpop.f32.mrf.mxu0
    %v1271 = vpop.f32.mrf.mxu0
    %1272 = vdwg.mxu0
    %v1274 = vrot.slane %v1267, 4
    %v1276 = vadd.f32 %v1034, %v1274
    %v1277 = vxor.u32 %v1276, 2147483648
    %v1278 = vmul.f32 %v1277, 1.442695
    %v1279 = vpow.pop %v1278
    %v1280 = vadd.f32 %v1279, 1.0
    %v1281 = vrcp.pop %v1280
    %v1282 = vmul.f32 1.0, %v1281
    %v1283 = vadd.f32 %v1269, %v1128
    %v1285 = vrot.slane %v1283, 4
    %v1287 = vmul.f32 %v1282, %v1285
    %v1288 = vadd.f32 %v1035, %v1287
    %v1289 = vtanh.pop %v1288
    %v1290 = vsub.f32 1.0, %v1282
    %1292 = vrot.lane.b32.xlu0 %v1289, 64
    %v1293 = vpop.permute.xlu0 %1292
    %v1295 = vmul.f32 %v1290, %v1293
    %v1297 = vrot.slane %v1223, 6
    %v1299 = vmul.f32 %v1282, %v1297
    %v1300 = vadd.f32 %v1295, %v1299
    %v1301 = vpack.c.bf16 %v1300, %v1300
    %v1303 = vrot.slane %v1301, 2
    %1304 = vrot.lane.b32.xlu0 %v1303, 64
    %v1305 = vpop.permute.xlu0 %1304
    %v1307 = vsel %vm246, %v1305, 0
    %1309 = vmatprep.subr.bf16.mxu0 0
    %1310 = vmatpush1.bf16.msra.mxu0 0
    %1311 = vmatprep.subr.bf16.mxu0 0
    %1312 = vmatpush1.bf16.msra.mxu0 0
    %1313 = vmatprep.subr.bf16.mxu0 0
    %1314 = vmatpush1.bf16.msra.mxu0 0
    %1315 = vmatprep.subr.bf16.mxu0 0
    %1316 = vmatpush1.bf16.msra.mxu0 0
    %1317 = vmatprep.subr.bf16.mxu0 %v1067
    %1318 = vmatpush1.bf16.msra.mxu0 %v1066
    %1319 = vmatprep.subr.bf16.mxu0 %v1065
    %1320 = vmatpush1.bf16.msra.mxu0 %v1064
    %1321 = vmatprep.subr.bf16.mxu0 %v1063
    %1322 = vmatpush1.bf16.msra.mxu0 %v1062
    %1323 = vmatprep.subr.bf16.mxu0 %v1061
    %1324 = vmatpush1.bf16.msra.mxu0 %v1060
    %1325 = vmatprep.subr.bf16.mxu0 0
    %1326 = vmatpush2.bf16.msra.mxu0 0
    %1327 = vmatprep.subr.bf16.mxu0 0
    %1328 = vmatpush2.bf16.msra.mxu0 0
    %1329 = vmatprep.subr.bf16.mxu0 0
    %1330 = vmatpush2.bf16.msra.mxu0 0
    %1331 = vmatprep.subr.bf16.mxu0 0
    %1332 = vmatpush2.bf16.msra.mxu0 0
    %1333 = vmatprep.subr.bf16.mxu0 0
    %1334 = vmatpush2.bf16.msra.mxu0 0
    %1335 = vmatprep.subr.bf16.mxu0 0
    %1336 = vmatpush2.bf16.msra.mxu0 0
    %1337 = vmatprep.subr.bf16.mxu0 0
    %1338 = vmatpush2.bf16.msra.mxu0 0
    %1339 = vmatprep.subr.bf16.mxu0 0
    %1340 = vmatpush2.bf16.msra.mxu0 0
    %1341 = vmatprep.mubr.bf16.mxu0 0
    %1342 = vmatmul.mubr.bf16.gmra.mxu0 %v1307
    %v1343 = vpop.f32.mrf.mxu0
    %v1344 = vadd.f32 0.0, %v1343
    %v1345 = vpop.f32.mrf.mxu0
    %v1346 = vadd.f32 0.0, %v1345
    %v1347 = vpop.f32.mrf.mxu0
    %v1348 = vpop.f32.mrf.mxu0
    %1349 = vdwg.mxu0
    %v1351 = vrot.slane %v1344, 2
    %v1353 = vadd.f32 %v1146, %v1351
    %v1354 = vxor.u32 %v1353, 2147483648
    %v1355 = vmul.f32 %v1354, 1.442695
    %v1356 = vpow.pop %v1355
    %v1357 = vadd.f32 %v1356, 1.0
    %v1358 = vrcp.pop %v1357
    %v1359 = vmul.f32 1.0, %v1358
    %v1360 = vadd.f32 %v1346, %v1128
    %v1362 = vrot.slane %v1360, 2
    %v1364 = vmul.f32 %v1359, %v1362
    %v1365 = vadd.f32 %v1147, %v1364
    %v1366 = vtanh.pop %v1365
    %v1367 = vsub.f32 1.0, %v1359
    %1369 = vrot.lane.b32.xlu0 %v1366, 64
    %v1370 = vpop.permute.xlu0 %1369
    %v1372 = vmul.f32 %v1367, %v1370
    %v1374 = vrot.slane %v1300, 6
    %v1376 = vmul.f32 %v1359, %v1374
    %v1377 = vadd.f32 %v1372, %v1376
    %v1380 = vrot.slane %v1020, 6
    %v1381 = vrot.slane %v1022, 6
    %v1384 = vsel %vm196, %v1024, %v1380
    %v1385 = vsel %vm197, %v1026, %v1381
    %v1386 = vpack.c.bf16 %v1377, %v1377
    %v1388 = vrot.slane %v1386, 3
    %1389 = vrot.lane.b32.xlu0 %v1388, 64
    %v1390 = vpop.permute.xlu0 %1389
    %v1392 = vsel %vm246, %v1390, 0
    %1394 = vmatprep.subr.bf16.mxu0 0
    %1395 = vmatpush1.bf16.msra.mxu0 0
    %1396 = vmatprep.subr.bf16.mxu0 0
    %1397 = vmatpush1.bf16.msra.mxu0 0
    %1398 = vmatprep.subr.bf16.mxu0 0
    %1399 = vmatpush1.bf16.msra.mxu0 0
    %1400 = vmatprep.subr.bf16.mxu0 0
    %1401 = vmatpush1.bf16.msra.mxu0 0
    %1402 = vmatprep.subr.bf16.mxu0 %v1067
    %1403 = vmatpush1.bf16.msra.mxu0 %v1066
    %1404 = vmatprep.subr.bf16.mxu0 %v1065
    %1405 = vmatpush1.bf16.msra.mxu0 %v1064
    %1406 = vmatprep.subr.bf16.mxu0 %v1063
    %1407 = vmatpush1.bf16.msra.mxu0 %v1062
    %1408 = vmatprep.subr.bf16.mxu0 %v1061
    %1409 = vmatpush1.bf16.msra.mxu0 %v1060
    %1410 = vmatprep.subr.bf16.mxu0 0
    %1411 = vmatpush2.bf16.msra.mxu0 0
    %1412 = vmatprep.subr.bf16.mxu0 0
    %1413 = vmatpush2.bf16.msra.mxu0 0
    %1414 = vmatprep.subr.bf16.mxu0 0
    %1415 = vmatpush2.bf16.msra.mxu0 0
    %1416 = vmatprep.subr.bf16.mxu0 0
    %1417 = vmatpush2.bf16.msra.mxu0 0
    %1418 = vmatprep.subr.bf16.mxu0 0
    %1419 = vmatpush2.bf16.msra.mxu0 0
    %1420 = vmatprep.subr.bf16.mxu0 0
    %1421 = vmatpush2.bf16.msra.mxu0 0
    %1422 = vmatprep.subr.bf16.mxu0 0
    %1423 = vmatpush2.bf16.msra.mxu0 0
    %1424 = vmatprep.subr.bf16.mxu0 0
    %1425 = vmatpush2.bf16.msra.mxu0 0
    %1426 = vmatprep.mubr.bf16.mxu0 0
    %1427 = vmatmul.mubr.bf16.gmra.mxu0 %v1392
    %v1428 = vpop.f32.mrf.mxu0
    %v1429 = vadd.f32 0.0, %v1428
    %v1430 = vpop.f32.mrf.mxu0
    %v1431 = vadd.f32 0.0, %v1430
    %v1432 = vpop.f32.mrf.mxu0
    %v1433 = vpop.f32.mrf.mxu0
    %1434 = vdwg.mxu0
    %v1435 = vadd.f32 %v1384, %v1429
    %v1436 = vxor.u32 %v1435, 2147483648
    %v1437 = vmul.f32 %v1436, 1.442695
    %v1438 = vpow.pop %v1437
    %v1439 = vadd.f32 %v1438, 1.0
    %v1440 = vrcp.pop %v1439
    %v1441 = vmul.f32 1.0, %v1440
    %v1442 = vadd.f32 %v1431, %v1128
    %v1443 = vmul.f32 %v1441, %v1442
    %v1444 = vadd.f32 %v1385, %v1443
    %v1445 = vtanh.pop %v1444
    %v1446 = vsub.f32 1.0, %v1441
    %1448 = vrot.lane.b32.xlu0 %v1445, 64
    %v1449 = vpop.permute.xlu0 %1448
    %v1451 = vmul.f32 %v1446, %v1449
    %v1453 = vrot.slane %v1377, 6
    %v1455 = vmul.f32 %v1441, %v1453
    %v1456 = vadd.f32 %v1451, %v1455
    %v1457 = vrot.slane %v1020, 2
    %v1458 = vrot.slane %v1022, 2
    %v1461 = vsel %vm196, %v1024, %v1457
    %v1462 = vsel %vm197, %v1026, %v1458
    %v1463 = vpack.c.bf16 %v1456, %v1456
    %1465 = vrot.lane.b32.xlu0 %v1463, 64
    %v1466 = vpop.permute.xlu0 %1465
    %v1468 = vsel %vm246, %v1466, 0
    %1470 = vmatprep.subr.bf16.mxu0 0
    %1471 = vmatpush1.bf16.msra.mxu0 0
    %1472 = vmatprep.subr.bf16.mxu0 0
    %1473 = vmatpush1.bf16.msra.mxu0 0
    %1474 = vmatprep.subr.bf16.mxu0 0
    %1475 = vmatpush1.bf16.msra.mxu0 0
    %1476 = vmatprep.subr.bf16.mxu0 0
    %1477 = vmatpush1.bf16.msra.mxu0 0
    %1478 = vmatprep.subr.bf16.mxu0 %v1067
    %1479 = vmatpush1.bf16.msra.mxu0 %v1066
    %1480 = vmatprep.subr.bf16.mxu0 %v1065
    %1481 = vmatpush1.bf16.msra.mxu0 %v1064
    %1482 = vmatprep.subr.bf16.mxu0 %v1063
    %1483 = vmatpush1.bf16.msra.mxu0 %v1062
    %1484 = vmatprep.subr.bf16.mxu0 %v1061
    %1485 = vmatpush1.bf16.msra.mxu0 %v1060
    %1486 = vmatprep.subr.bf16.mxu0 0
    %1487 = vmatpush2.bf16.msra.mxu0 0
    %1488 = vmatprep.subr.bf16.mxu0 0
    %1489 = vmatpush2.bf16.msra.mxu0 0
    %1490 = vmatprep.subr.bf16.mxu0 0
    %1491 = vmatpush2.bf16.msra.mxu0 0
    %1492 = vmatprep.subr.bf16.mxu0 0
    %1493 = vmatpush2.bf16.msra.mxu0 0
    %1494 = vmatprep.subr.bf16.mxu0 0
    %1495 = vmatpush2.bf16.msra.mxu0 0
    %1496 = vmatprep.subr.bf16.mxu0 0
    %1497 = vmatpush2.bf16.msra.mxu0 0
    %1498 = vmatprep.subr.bf16.mxu0 0
    %1499 = vmatpush2.bf16.msra.mxu0 0
    %1500 = vmatprep.subr.bf16.mxu0 0
    %1501 = vmatpush2.bf16.msra.mxu0 0
    %1502 = vmatprep.mubr.bf16.mxu0 0
    %1503 = vmatmul.mubr.bf16.gmra.mxu0 %v1468
    %v1504 = vpop.f32.mrf.mxu0
    %v1505 = vadd.f32 0.0, %v1504
    %v1506 = vpop.f32.mrf.mxu0
    %v1507 = vadd.f32 0.0, %v1506
    %v1508 = vpop.f32.mrf.mxu0
    %v1509 = vpop.f32.mrf.mxu0
    %1510 = vdwg.mxu0
    %v1512 = vrot.slane %v1505, 6
    %v1514 = vadd.f32 %v1461, %v1512
    %v1515 = vxor.u32 %v1514, 2147483648
    %v1516 = vmul.f32 %v1515, 1.442695
    %v1517 = vpow.pop %v1516
    %v1518 = vadd.f32 %v1517, 1.0
    %v1519 = vrcp.pop %v1518
    %v1520 = vmul.f32 1.0, %v1519
    %v1521 = vadd.f32 %v1507, %v1128
    %v1523 = vrot.slane %v1521, 6
    %v1525 = vmul.f32 %v1520, %v1523
    %v1526 = vadd.f32 %v1462, %v1525
    %v1527 = vtanh.pop %v1526
    %v1528 = vsub.f32 1.0, %v1520
    %1530 = vrot.lane.b32.xlu0 %v1527, 64
    %v1531 = vpop.permute.xlu0 %1530
    %v1533 = vmul.f32 %v1528, %v1531
    %v1535 = vrot.slane %v1456, 6
    %v1537 = vmul.f32 %v1520, %v1535
    %v1538 = vadd.f32 %v1533, %v1537
    %v1539 = vpack.c.bf16 %v1538, %v1538
    %v1541 = vrot.slane %v1539, 1
    %1542 = vrot.lane.b32.xlu0 %v1541, 64
    %v1543 = vpop.permute.xlu0 %1542
    %v1545 = vsel %vm246, %v1543, 0
    %1547 = vmatprep.subr.bf16.mxu0 0
    %1548 = vmatpush1.bf16.msra.mxu0 0
    %1549 = vmatprep.subr.bf16.mxu0 0
    %1550 = vmatpush1.bf16.msra.mxu0 0
    %1551 = vmatprep.subr.bf16.mxu0 0
    %1552 = vmatpush1.bf16.msra.mxu0 0
    %1553 = vmatprep.subr.bf16.mxu0 0
    %1554 = vmatpush1.bf16.msra.mxu0 0
    %1555 = vmatprep.subr.bf16.mxu0 %v1067
    %1556 = vmatpush1.bf16.msra.mxu0 %v1066
    %1557 = vmatprep.subr.bf16.mxu0 %v1065
    %1558 = vmatpush1.bf16.msra.mxu0 %v1064
    %1559 = vmatprep.subr.bf16.mxu0 %v1063
    %1560 = vmatpush1.bf16.msra.mxu0 %v1062
    %1561 = vmatprep.subr.bf16.mxu0 %v1061
    %1562 = vmatpush1.bf16.msra.mxu0 %v1060
    %1563 = vmatprep.subr.bf16.mxu0 0
    %1564 = vmatpush2.bf16.msra.mxu0 0
    %1565 = vmatprep.subr.bf16.mxu0 0
    %1566 = vmatpush2.bf16.msra.mxu0 0
    %1567 = vmatprep.subr.bf16.mxu0 0
    %1568 = vmatpush2.bf16.msra.mxu0 0
    %1569 = vmatprep.subr.bf16.mxu0 0
    %1570 = vmatpush2.bf16.msra.mxu0 0
    %1571 = vmatprep.subr.bf16.mxu0 0
    %1572 = vmatpush2.bf16.msra.mxu0 0
    %1573 = vmatprep.subr.bf16.mxu0 0
    %1574 = vmatpush2.bf16.msra.mxu0 0
    %1575 = vmatprep.subr.bf16.mxu0 0
    %1576 = vmatpush2.bf16.msra.mxu0 0
    %1577 = vmatprep.subr.bf16.mxu0 0
    %1578 = vmatpush2.bf16.msra.mxu0 0
    %1579 = vmatprep.mubr.bf16.mxu0 0
    %1580 = vmatmul.mubr.bf16.gmra.mxu0 %v1545
    %v1581 = vpop.f32.mrf.mxu0
    %v1582 = vadd.f32 0.0, %v1581
    %v1583 = vpop.f32.mrf.mxu0
    %v1584 = vadd.f32 0.0, %v1583
    %v1585 = vpop.f32.mrf.mxu0
    %v1586 = vpop.f32.mrf.mxu0
    %1587 = vdwg.mxu0
    %v1589 = vrot.slane %v1582, 4
    %v1591 = vadd.f32 %v1384, %v1589
    %v1592 = vxor.u32 %v1591, 2147483648
    %v1593 = vmul.f32 %v1592, 1.442695
    %v1594 = vpow.pop %v1593
    %v1595 = vadd.f32 %v1594, 1.0
    %v1596 = vrcp.pop %v1595
    %v1597 = vmul.f32 1.0, %v1596
    %v1598 = vadd.f32 %v1584, %v1128
    %v1600 = vrot.slane %v1598, 4
    %v1602 = vmul.f32 %v1597, %v1600
    %v1603 = vadd.f32 %v1385, %v1602
    %v1604 = vtanh.pop %v1603
    %v1605 = vsub.f32 1.0, %v1597
    %1607 = vrot.lane.b32.xlu0 %v1604, 64
    %v1608 = vpop.permute.xlu0 %1607
    %v1610 = vmul.f32 %v1605, %v1608
    %v1612 = vrot.slane %v1538, 6
    %v1614 = vmul.f32 %v1597, %v1612
    %v1615 = vadd.f32 %v1610, %v1614
    %v1616 = vpack.c.bf16 %v1615, %v1615
    %v1618 = vrot.slane %v1616, 2
    %1619 = vrot.lane.b32.xlu0 %v1618, 64
    %v1620 = vpop.permute.xlu0 %1619
    %v1622 = vsel %vm246, %v1620, 0
    %1624 = vmatprep.subr.bf16.mxu0 0
    %1625 = vmatpush1.bf16.msra.mxu0 0
    %1626 = vmatprep.subr.bf16.mxu0 0
    %1627 = vmatpush1.bf16.msra.mxu0 0
    %1628 = vmatprep.subr.bf16.mxu0 0
    %1629 = vmatpush1.bf16.msra.mxu0 0
    %1630 = vmatprep.subr.bf16.mxu0 0
    %1631 = vmatpush1.bf16.msra.mxu0 0
    %1632 = vmatprep.subr.bf16.mxu0 %v1067
    %1633 = vmatpush1.bf16.msra.mxu0 %v1066
    %1634 = vmatprep.subr.bf16.mxu0 %v1065
    %1635 = vmatpush1.bf16.msra.mxu0 %v1064
    %1636 = vmatprep.subr.bf16.mxu0 %v1063
    %1637 = vmatpush1.bf16.msra.mxu0 %v1062
    %1638 = vmatprep.subr.bf16.mxu0 %v1061
    %1639 = vmatpush1.bf16.msra.mxu0 %v1060
    %1640 = vmatprep.subr.bf16.mxu0 0
    %1641 = vmatpush2.bf16.msra.mxu0 0
    %1642 = vmatprep.subr.bf16.mxu0 0
    %1643 = vmatpush2.bf16.msra.mxu0 0
    %1644 = vmatprep.subr.bf16.mxu0 0
    %1645 = vmatpush2.bf16.msra.mxu0 0
    %1646 = vmatprep.subr.bf16.mxu0 0
    %1647 = vmatpush2.bf16.msra.mxu0 0
    %1648 = vmatprep.subr.bf16.mxu0 0
    %1649 = vmatpush2.bf16.msra.mxu0 0
    %1650 = vmatprep.subr.bf16.mxu0 0
    %1651 = vmatpush2.bf16.msra.mxu0 0
    %1652 = vmatprep.subr.bf16.mxu0 0
    %1653 = vmatpush2.bf16.msra.mxu0 0
    %1654 = vmatprep.subr.bf16.mxu0 0
    %1655 = vmatpush2.bf16.msra.mxu0 0
    %1656 = vmatprep.mubr.bf16.mxu0 0
    %1657 = vmatmul.mubr.bf16.gmra.mxu0 %v1622
    %v1658 = vpop.f32.mrf.mxu0
    %v1659 = vadd.f32 0.0, %v1658
    %v1660 = vpop.f32.mrf.mxu0
    %v1661 = vadd.f32 0.0, %v1660
    %v1662 = vpop.f32.mrf.mxu0
    %v1663 = vpop.f32.mrf.mxu0
    %1664 = vdwg.mxu0
    %v1666 = vrot.slane %v1659, 2
    %v1668 = vadd.f32 %v1461, %v1666
    %v1669 = vxor.u32 %v1668, 2147483648
    %v1670 = vmul.f32 %v1669, 1.442695
    %v1671 = vpow.pop %v1670
    %v1672 = vadd.f32 %v1671, 1.0
    %v1673 = vrcp.pop %v1672
    %v1674 = vmul.f32 1.0, %v1673
    %v1675 = vadd.f32 %v1661, %v1128
    %v1677 = vrot.slane %v1675, 2
    %v1679 = vmul.f32 %v1674, %v1677
    %v1680 = vadd.f32 %v1462, %v1679
    %v1681 = vtanh.pop %v1680
    %v1682 = vsub.f32 1.0, %v1674
    %1684 = vrot.lane.b32.xlu0 %v1681, 64
    %v1685 = vpop.permute.xlu0 %1684
    %v1687 = vmul.f32 %v1682, %v1685
    %v1689 = vrot.slane %v1615, 6
    %v1691 = vmul.f32 %v1674, %v1689
    %v1692 = vadd.f32 %v1687, %v1691
    %v1693 = vsel %vm867, %v1141, %v1223
    %v1694 = vsel %vm869, %v1693, %v1300
    %v1695 = vsel %vm871, %v1694, %v1377
    %v1696 = vsel %vm867, %v1456, %v1538
    %v1697 = vsel %vm869, %v1696, %v1615
    %v1698 = vsel %vm871, %v1697, %v1692
    %v1700 = vrot.slane %v1692, 6
    %v1702 = vrot.slane %v1615, 2
    %v1704 = vrot.slane %v1456, 2
    %v1706 = vrot.slane %v1300, 2
    %v1708 = vrot.slane %v1141, 2
    %v1710 = vsel %vm867, %v1700, %v1702
    %v1711 = vsel %vm869, %v1710, %v1612
    %v1712 = vsel %vm871, %v1711, %v1704
    %v1713 = vsel %vm867, %v1453, %v1706
    %v1714 = vsel %vm869, %v1713, %v1297
    %v1715 = vsel %vm871, %v1714, %v1708
    %1718 = vrot.lane.b32.xlu0 %v1695, 64
    %v1719 = vpop.permute.xlu0 %1718
    %1720 = vrot.lane.b32.xlu0 %v1698, 64
    %v1721 = vpop.permute.xlu0 %1720
    %1726 = vrot.lane.b32.xlu0 %v1712, 64
    %v1727 = vpop.permute.xlu0 %1726
    %1728 = vrot.lane.b32.xlu0 %v1715, 64
    %v1729 = vpop.permute.xlu0 %1728
    %v1732 = vsel %vm909, %v1719, %v1727
    %v1733 = vsel %vm909, %v1721, %v1729
    %v1734 = vpack.c.bf16 %v1733, %v1732
    %v1735 = vld [vmem:[%s9] sm:$0xf]
    %v1736 = vld [vmem:[%s9 + $0x4] sm:$0xf]
    %v1737 = vld [vmem:[%s9 + $0x8] sm:$0xf]
    %v1738 = vld [vmem:[%s9 + $0xc] sm:$0xf]
    %v1739 = vld [vmem:[%s9 + $0x10] sm:$0xf]
    %v1740 = vld [vmem:[%s9 + $0x14] sm:$0xf]
    %v1741 = vld [vmem:[%s9 + $0x18] sm:$0xf]
    %v1742 = vld [vmem:[%s9 + $0x1c] sm:$0xf]
    %v1743 = vld [vmem:[%s10] sm:$0x1]
    %v1745 = vlaneseq
    %v1746 = vshrl.u32 %v1745, 7
    %v1747 = vsub.s32 0, %v1746
    %v1748 = vrot.slane %v1743, %v1747
    %v1758 = vunpack.c.l.b16 %v1735
    %v1759 = vunpack.c.l.b16 %v1736
    %v1760 = vunpack.c.l.b16 %v1737
    %v1761 = vunpack.c.l.b16 %v1738
    %v1762 = vunpack.c.l.b16 %v1739
    %v1763 = vunpack.c.l.b16 %v1740
    %v1764 = vunpack.c.l.b16 %v1741
    %v1765 = vunpack.c.l.b16 %v1742
    %v1766 = vpack.c.b16 %v1759, %v1758
    %v1767 = vpack.c.b16 %v1761, %v1760
    %v1768 = vpack.c.b16 %v1763, %v1762
    %v1769 = vpack.c.b16 %v1765, %v1764
    %v1775 = vsel %vm246, %v1734, 0
    %1777 = vmatprep.subr.bf16.mxu0 0
    %1778 = vmatpush1.bf16.msra.mxu0 0
    %1779 = vmatprep.subr.bf16.mxu0 0
    %1780 = vmatpush1.bf16.msra.mxu0 0
    %1781 = vmatprep.subr.bf16.mxu0 0
    %1782 = vmatpush1.bf16.msra.mxu0 0
    %1783 = vmatprep.subr.bf16.mxu0 0
    %1784 = vmatpush1.bf16.msra.mxu0 0
    %1785 = vmatprep.subr.bf16.mxu0 0
    %1786 = vmatpush1.bf16.msra.mxu0 %v1769
    %1787 = vmatprep.subr.bf16.mxu0 0
    %1788 = vmatpush1.bf16.msra.mxu0 %v1768
    %1789 = vmatprep.subr.bf16.mxu0 0
    %1790 = vmatpush1.bf16.msra.mxu0 %v1767
    %1791 = vmatprep.subr.bf16.mxu0 0
    %1792 = vmatpush1.bf16.msra.mxu0 %v1766
    %1793 = vmatprep.subr.bf16.mxu0 0
    %1794 = vmatpush2.bf16.msra.mxu0 0
    %1795 = vmatprep.subr.bf16.mxu0 0
    %1796 = vmatpush2.bf16.msra.mxu0 0
    %1797 = vmatprep.subr.bf16.mxu0 0
    %1798 = vmatpush2.bf16.msra.mxu0 0
    %1799 = vmatprep.subr.bf16.mxu0 0
    %1800 = vmatpush2.bf16.msra.mxu0 0
    %1801 = vmatprep.subr.bf16.mxu0 0
    %1802 = vmatpush2.bf16.msra.mxu0 0
    %1803 = vmatprep.subr.bf16.mxu0 0
    %1804 = vmatpush2.bf16.msra.mxu0 0
    %1805 = vmatprep.subr.bf16.mxu0 0
    %1806 = vmatpush2.bf16.msra.mxu0 0
    %1807 = vmatprep.subr.bf16.mxu0 0
    %1808 = vmatpush2.bf16.msra.mxu0 0
    %1809 = vmatprep.mubr.bf16.mxu0 0
    %1810 = vmatmul.mubr.bf16.gmra.mxu0 %v1775
    %v1811 = vpop.f32.mrf.mxu0
    %v1812 = vadd.f32 %v1748, %v1811
    %v1813 = vpop.f32.mrf.mxu0
    %v1814 = vpop.f32.mrf.mxu0
    %v1815 = vadd.f32 %v1748, %v1814
    %v1816 = vpop.f32.mrf.mxu0
    %1817 = vdwg.mxu0
    %v1818 = vmax.f32 %v1812, 0.0
    %v1819 = vmax.f32 %v1815, 0.0
    %v1820 = vpack.c.bf16 %v1819, %v1818
    %v1821 = vld [vmem:[%s11] sm:$0xf]
    %v1822 = vld [vmem:[%s11 + $0x4] sm:$0xf]
    %v1823 = vld [vmem:[#allocation2] sm:$0x1]
    %v1825 = vlaneseq
    %v1826 = vshrl.u32 %v1825, 7
    %v1827 = vsub.s32 0, %v1826
    %v1828 = vrot.slane %v1823, %v1827
    %v1832 = vunpack.c.l.b16 %v1821
    %v1833 = vunpack.c.l.b16 %v1822
    %v1834 = vpack.c.b16 %v1833, %v1832
    %v1837 = vsel %vm118, %v1820, 0
    %1839 = vmatprep.subr.bf16.mxu0 0
    %1840 = vmatpush1.bf16.msra.mxu0 0
    %1841 = vmatprep.subr.bf16.mxu0 0
    %1842 = vmatpush1.bf16.msra.mxu0 0
    %1843 = vmatprep.subr.bf16.mxu0 0
    %1844 = vmatpush1.bf16.msra.mxu0 0
    %1845 = vmatprep.subr.bf16.mxu0 0
    %1846 = vmatpush1.bf16.msra.mxu0 0
    %1847 = vmatprep.subr.bf16.mxu0 0
    %1848 = vmatpush1.bf16.msra.mxu0 0
    %1849 = vmatprep.subr.bf16.mxu0 0
    %1850 = vmatpush1.bf16.msra.mxu0 0
    %1851 = vmatprep.subr.bf16.mxu0 0
    %1852 = vmatpush1.bf16.msra.mxu0 0
    %1853 = vmatprep.subr.bf16.mxu0 0
    %1854 = vmatpush1.bf16.msra.mxu0 %v1834
    %1855 = vmatprep.subr.bf16.mxu0 0
    %1856 = vmatpush2.bf16.msra.mxu0 0
    %1857 = vmatprep.subr.bf16.mxu0 0
    %1858 = vmatpush2.bf16.msra.mxu0 0
    %1859 = vmatprep.subr.bf16.mxu0 0
    %1860 = vmatpush2.bf16.msra.mxu0 0
    %1861 = vmatprep.subr.bf16.mxu0 0
    %1862 = vmatpush2.bf16.msra.mxu0 0
    %1863 = vmatprep.subr.bf16.mxu0 0
    %1864 = vmatpush2.bf16.msra.mxu0 0
    %1865 = vmatprep.subr.bf16.mxu0 0
    %1866 = vmatpush2.bf16.msra.mxu0 0
    %1867 = vmatprep.subr.bf16.mxu0 0
    %1868 = vmatpush2.bf16.msra.mxu0 0
    %1869 = vmatprep.subr.bf16.mxu0 0
    %1870 = vmatpush2.bf16.msra.mxu0 0
    %1871 = vmatprep.mubr.bf16.mxu0 0
    %1872 = vmatmul.mubr.bf16.gmra.mxu0 %v1837
    %v1873 = vpop.f32.mrf.mxu0
    %v1874 = vadd.f32 %v1828, %v1873
    %v1875 = vpop.f32.mrf.mxu0
    %v1876 = vpop.f32.mrf.mxu0
    %v1877 = vadd.f32 %v1828, %v1876
    %v1878 = vpop.f32.mrf.mxu0
    %1879 = vdwg.mxu0
    %v1880 = vxor.u32 %v1874, 2147483648
    %v1881 = vxor.u32 %v1877, 2147483648
    %v1882 = vmul.f32 %v1880, 1.442695
    %v1883 = vpow.pop %v1882
    %v1884 = vmul.f32 %v1881, 1.442695
    %v1885 = vpow.pop %v1884
    %v1886 = vadd.f32 %v1883, 1.0
    %v1887 = vadd.f32 %v1885, 1.0
    %v1888 = vrcp.pop %v1886
    %v1889 = vmul.f32 1.0, %v1888
    %v1890 = vrcp.pop %v1887
    %v1891 = vmul.f32 1.0, %v1890
    %vm1892 = vcmask 7168
    %1893 = vst.msk [vmem:[%s13] sm:$0xff] %vm1892, %v1889
    %1894 = vst.msk [vmem:[%s13 + $0x8] sm:$0xff] %vm1892, %v1891
    %v1895 = vrot.slane %v866, 4
    %1896 = vrot.lane.b32.xlu0 %v1895, 96
    %v1897 = vpop.permute.xlu0 %1896
    %v1899 = vrot.slane %v1692, 2
    %1901 = vrot.lane.b32.xlu0 %v1692, 96
    %v1902 = vpop.permute.xlu0 %1901
    %v1904 = vsel %vm867, %v877, %v1897
    %v1905 = vsel %vm869, %v1904, %v1899
    %v1906 = vsel %vm871, %v1905, %v1902
    %1908 = vrot.lane.b32.xlu0 %v1906, 64
    %v1909 = vpop.permute.xlu0 %1908
    %1911 = vst.msk [vmem:[#allocation8] sm:$0xff] %vm909, %v1909
    // Predicated region
    $region62: #{gru_sex_net_forward.1} parent=1 // pred_check
      _
    $region63: #{gru_sex_net_forward.1} parent=1 // pred_check_branch
      %1913 = sbr.rel (0) target = $region65
    $region64: #{gru_sex_net_forward.1} parent=1 // pred_region
      _
    $region65: #{gru_sex_net_forward.1} parent=1 // pred_fallthru
      _
    // Predicated region
    $region66: #{gru_sex_net_forward.1} parent=1 // pred_check
      _
    $region67: #{gru_sex_net_forward.1} parent=1 // pred_check_branch
      %1915 = sbr.rel (0) target = $region69
    $region68: #{gru_sex_net_forward.1} parent=1 // pred_region
      %s1917 = ssub.s32 128, 128
      %1918 = vsyncadd [#allocation5], %s1917
      %s1920 = sshll.u32 [#allocation8], 4
      %s1921 = int_to_ptr.vmem [resolvable:$true] %s1920
      %1923 = dma.vmem_to_hbm [thread:$0]  %s1921, 128, %s14, [#allocation5]
    $region69: #{gru_sex_net_forward.1} parent=1 // pred_fallthru
      _
    // Predicated region
    $region70: #{gru_sex_net_forward.1} parent=1 // pred_check
      _
    $region71: #{gru_sex_net_forward.1} parent=1 // pred_check_branch
      %1925 = sbr.rel (0) target = $region73
    $region72: #{gru_sex_net_forward.1} parent=1 // pred_region
      _
    $region73: #{gru_sex_net_forward.1} parent=1 // pred_fallthru
      _
    // Predicated region
    $region74: #{gru_sex_net_forward.1} parent=1 // pred_check
      _
    $region75: #{gru_sex_net_forward.1} parent=1 // pred_check_branch
      %1927 = sbr.rel (0) target = $region77
    $region76: #{gru_sex_net_forward.1} parent=1 // pred_region
      %1928 = dma.done [#allocation5], 128
    $region77: #{gru_sex_net_forward.1} parent=1 // pred_fallthru
      _
    %1929 = vsyncpa [#allocation4], 1
    %1930 = vsyncpa [#allocation7], 1
    %1931 = vsyncpa [#allocation5], 1

</llo_original>
